<compile_context>
chip_gen: v7x
topology: tpu7x:2x2x1
jax: 0.10.0
libtpu: 0.0.40
codegen_flags: <defaults>
</compile_context>

<pallas_src>
import numpy as np

import jax
import jax.numpy as jnp
from jax.experimental import pallas as pl
from jax.experimental.pallas import tpu as pltpu

CHAR = 15      # vocab / output classes
IN_SIZE = 32   # embedding dim
HIDDEN = 16    # LSTM hidden size
NUM_LAYER = 2  # stacked LSTM layers (kernel is written for exactly 2)
BP = 8         # batch rows padded to the sublane count

_VMEM = pl.BlockSpec(memory_space=pltpu.MemorySpace.VMEM)
_SMEM = pl.BlockSpec(memory_space=pltpu.MemorySpace.SMEM)


def lstm_fused_kernel(tok_ref, h0_ref, c0_ref,
                      emb_ref, wih0_ref, b0_ref,
                      whh0_ref, w1_ref, b1_ref,
                      fcw_ref, fcb_ref,
                      probs_ref, hn_ref, cn_ref,
                      table0_ref, xp_ref, ybm_ref):
  """Fused embedding + 2-layer LSTM recurrence + FC + softmax.

  tok_ref : (B*T,) int32 in SMEM, row-major (index b*T + t).
  h0_ref / c0_ref : (2, BP, H) padded initial state (rows >= B are dummies).
  probs_ref : (B*T, C) softmax probabilities, PyTorch batch-major row order.
  hn_ref / cn_ref : (2, B, H) final recurrent state.
  Scratch: table0_ref (CHAR, 4H) fused embedding+input-projection table,
  xp_ref (T*BP, 4H) hoisted per-token input projection (time-major),
  ybm_ref (B*T, H) batch-major layer-1 outputs for the FC epilogue.
  """
  _, B, H = hn_ref.shape
  BPk = h0_ref.shape[1]
  T = tok_ref.shape[0] // B
  G = 4 * H

  # ---- one-time prologue (off the recurrence critical path) ----------------
  # Embedding fused with the layer-0 input projection + bias:
  #   table0[v, :] = emb[v, :] @ W_ih0 + b0
  table0_ref[...] = (
      jnp.dot(emb_ref[...], wih0_ref[...], preferred_element_type=jnp.float32)
      + b0_ref[...])

  # Hoisted input projection for every (t, b): one dynamic row gather per token
  # (tokens come from SMEM), written time-major at sublane-aligned offsets.
  xp_ref[...] = jnp.zeros_like(xp_ref)          # keep pad rows defined
  for t in range(T):
    for b in range(B):
      tok = tok_ref[b * T + t]
      xp_ref[pl.ds(t * BPk + b, 1), :] = table0_ref[pl.ds(tok, 1), :]

  # ---- hoists: bf16 weights for the MXU, broadcast bias ---------------------
  whh0 = whh0_ref[...].astype(jnp.bfloat16)                 # (H, 4H)
  w1 = w1_ref[...].astype(jnp.bfloat16)                     # (2H, 4H) = [W_ih1; W_hh1]
  b1 = jnp.broadcast_to(b1_ref[...], (BPk, G))              # (BP, 4H)

  # Recurrent state carried in vector registers across the unrolled time loop.
  h0 = h0_ref[0]
  c0 = c0_ref[0]
  h1 = h0_ref[1]
  c1 = c0_ref[1]

  def cell(gates, c_prev):
    # gates: (BP, 4H) fused pre-activations, lane order i | f | o | g.
    ifo = jax.nn.sigmoid(gates[:, :3 * H])      # one EUP region for i, f, o
    g = jnp.tanh(gates[:, 3 * H:])              # one EUP region for g
    i = ifo[:, :H]
    f = ifo[:, H:2 * H]
    o = ifo[:, 2 * H:]
    c_new = f * c_prev + i * g
    h_new = o * jnp.tanh(c_new)
    return h_new, c_new

  # Fully unrolled time loop (T small and static): 2 MXU pushes per step,
  # no VMEM round-trips on the recurrence critical path.
  for t in range(T):
    xg = xp_ref[pl.ds(t * BPk, BPk), :]                     # (BP, 4H), aligned
    g0 = xg + jnp.dot(h0.astype(jnp.bfloat16), whh0,
                      preferred_element_type=jnp.float32)
    h0, c0 = cell(g0, c0)

    hcat = jnp.concatenate([h0, h1], axis=-1).astype(jnp.bfloat16)   # (BP, 2H)
    g1 = jnp.dot(hcat, w1, preferred_element_type=jnp.float32) + b1
    h1, c1 = cell(g1, c1)

    # Batch-major output rows (b*T + t); fire-and-forget, off the critical path.
    for b in range(B):
      ybm_ref[pl.ds(b * T + t, 1), :] = h1[b:b + 1, :]

  hn_ref[0] = h0[:B, :]
  hn_ref[1] = h1[:B, :]
  cn_ref[0] = c0[:B, :]
  cn_ref[1] = c1[:B, :]

  # ---- fused FC + softmax epilogue (exact normalization) --------------------
  logits = (jnp.dot(ybm_ref[...], fcw_ref[...],
                    preferred_element_type=jnp.float32) + fcb_ref[...])
  m = jnp.max(logits, axis=1, keepdims=True)
  e = jnp.exp(logits - m)
  probs_ref[...] = e / jnp.sum(e, axis=1, keepdims=True)


@jax.jit
def lstm_forward(tokens, h0, c0, params):
  """Equivalent of LSTM.forward(x, hidden, cell) -> (softmax(fc(y)), (h, c))."""
  B, T = tokens.shape
  L, _, H = h0.shape
  V, D = params["emb"].shape
  C = params["fc_w_t"].shape[1]
  assert L == NUM_LAYER == 2, "kernel is specialized for num_layer == 2"
  assert B <= BP

  # Tokens go straight to SMEM (row-major b*T + t order; reshape is free).
  tok_flat = tokens.reshape(B * T).astype(jnp.int32)
  # Pad batch to 8 sublane rows; pad rows never influence real rows.
  h0p = jnp.zeros((L, BP, H), jnp.float32).at[:, :B, :].set(h0)
  c0p = jnp.zeros((L, BP, H), jnp.float32).at[:, :B, :].set(c0)

  G = 4 * H
  flops = (2 * V * D * G                              # fused emb @ W_ih0 table
           + T * 2 * (BP * H * G + BP * 2 * H * G)    # recurrent matmuls
           + 2 * (B * T) * H * C)                     # fc
  transcendentals = T * 2 * BP * (3 * H + 2 * H) + (B * T) * C
  bytes_accessed = (4 * (h0p.size + c0p.size + 2 * L * B * H + B * T * C
                         + sum(int(params[k].size) for k in
                               ("emb", "wih0", "b0", "whh0", "w1", "b1",
                                "fc_w_t", "fc_b")))
                    + 4 * B * T)

  probs, hn, cn = pl.pallas_call(
      lstm_fused_kernel,
      out_shape=(jax.ShapeDtypeStruct((B * T, C), jnp.float32),
                 jax.ShapeDtypeStruct((L, B, H), jnp.float32),
                 jax.ShapeDtypeStruct((L, B, H), jnp.float32)),
      in_specs=[_SMEM] + [_VMEM] * 10,
      out_specs=(_VMEM, _VMEM, _VMEM),
      scratch_shapes=[
          pltpu.VMEM((V, G), jnp.float32),        # fused emb/input-proj table
          pltpu.VMEM((T * BP, G), jnp.float32),   # hoisted input projection
          pltpu.VMEM((B * T, H), jnp.float32),    # batch-major layer-1 outputs
      ],
      cost_estimate=pl.CostEstimate(flops=flops,
                                    transcendentals=transcendentals,
                                    bytes_accessed=bytes_accessed),
  )(tok_flat, h0p, c0p,
    params["emb"], params["wih0"], params["b0"],
    params["whh0"], params["w1"], params["b1"],
    params["fc_w_t"], params["fc_b"])

  return probs, (hn, cn)


def init_params(key, char=CHAR, in_size=IN_SIZE, hidden=HIDDEN):
  """Fused-gate weight layout.

  Gate column order along the 4H axis is i|f|o|g (sigmoid gates contiguous);
  biases are b_ih + b_hh folded; layer-1 weights are stacked
  w1 = [W_ih1 ; W_hh1].  Converting real PyTorch weights requires applying the
  same column permutation / fusion.
  """
  ks = jax.random.split(key, 9)
  s = 1.0 / float(np.sqrt(hidden))
  u = lambda k, shape: jax.random.uniform(k, shape, jnp.float32, -s, s)
  return {
      "emb": jax.random.normal(ks[0], (char, in_size), jnp.float32),
      # layer 0: input dim = in_size
      "wih0": u(ks[1], (in_size, 4 * hidden)),
      "whh0": u(ks[2], (hidden, 4 * hidden)),
      "b0": u(ks[3], (1, 4 * hidden)),
      # layer 1: [W_ih1 ; W_hh1] stacked -> one matmul per step
      "w1": u(ks[4], (2 * hidden, 4 * hidden)),
      "b1": u(ks[5], (1, 4 * hidden)),
      # fc: weight stored pre-transposed (H, C), bias (1, C)
      "fc_w_t": u(ks[6], (hidden, char)),
      "fc_b": u(ks[7], (1, char)),
  }


def reference_forward(tokens, h0, c0, p):
  """Pure-JAX f32 reference with identical semantics (sanity check)."""
  emb = p["emb"][tokens]                      # (B, T, D)
  B, T, _ = emb.shape
  H = h0.shape[2]

  def cell(gates, c):
    i = jax.nn.sigmoid(gates[:, 0 * H:1 * H])
    f = jax.nn.sigmoid(gates[:, 1 * H:2 * H])
    o = jax.nn.sigmoid(gates[:, 2 * H:3 * H])
    g = jnp.tanh(gates[:, 3 * H:4 * H])
    c_new = f * c + i * g
    return o * jnp.tanh(c_new), c_new

  h = [h0[0], h0[1]]
  c = [c0[0], c0[1]]
  ys = []
  for t in range(T):
    xt = emb[:, t, :]
    h[0], c[0] = cell(xt @ p["wih0"] + p["b0"] + h[0] @ p["whh0"], c[0])
    g1 = jnp.concatenate([h[0], h[1]], axis=-1) @ p["w1"] + p["b1"]
    h[1], c[1] = cell(g1, c[1])
    ys.append(h[1])
  y = jnp.stack(ys, axis=1).reshape(B * T, H)
  logits = y @ p["fc_w_t"] + p["fc_b"]
  return jax.nn.softmax(logits, axis=1), (jnp.stack(h), jnp.stack(c))


if __name__ == "__main__":
  key = jax.random.PRNGKey(0)
  k_param, k_tok = jax.random.split(key)

  B, T = 2, 8
  params = init_params(k_param)
  tokens = jax.random.randint(k_tok, (B, T), 0, CHAR, dtype=jnp.int32)
  h0 = jnp.zeros((NUM_LAYER, B, HIDDEN), jnp.float32)
  c0 = jnp.zeros((NUM_LAYER, B, HIDDEN), jnp.float32)

  probs, (hn, cn) = lstm_forward(tokens, h0, c0, params)
  jax.block_until_ready((probs, hn, cn))

  # correctness sanity check against the pure-JAX f32 reference
  probs_r, (hn_r, cn_r) = reference_forward(tokens, h0, c0, params)
  assert probs.shape == (B * T, CHAR)
  assert hn.shape == (NUM_LAYER, B, HIDDEN) and cn.shape == (NUM_LAYER, B, HIDDEN)
  # kernel uses bf16 MXU operands (f32 accumulation) for the recurrent matmuls,
  # so allow a small absolute deviation vs. the full-f32 reference.
  assert jnp.allclose(probs, probs_r, atol=3e-2, rtol=0.0)
  assert jnp.allclose(hn, hn_r, atol=3e-2, rtol=0.0)
  assert jnp.allclose(cn, cn_r, atol=3e-2, rtol=0.0)

  print("KERNEL_OK")
</pallas_src>

<mosaic_0001>
module attributes {stable_mosaic.version = 11 : i64} {
  func.func @lstm_fused_kernel(%arg0: memref<16xi32, #tpu.memory_space<smem>>, %arg1: memref<2x8x16xf32, #tpu.memory_space<vmem>>, %arg2: memref<2x8x16xf32, #tpu.memory_space<vmem>>, %arg3: memref<15x32xf32, #tpu.memory_space<vmem>>, %arg4: memref<32x64xf32, #tpu.memory_space<vmem>>, %arg5: memref<1x64xf32, #tpu.memory_space<vmem>>, %arg6: memref<16x64xf32, #tpu.memory_space<vmem>>, %arg7: memref<32x64xf32, #tpu.memory_space<vmem>>, %arg8: memref<1x64xf32, #tpu.memory_space<vmem>>, %arg9: memref<16x15xf32, #tpu.memory_space<vmem>>, %arg10: memref<1x15xf32, #tpu.memory_space<vmem>>, %arg11: memref<16x15xf32, #tpu.memory_space<vmem>>, %arg12: memref<2x2x16xf32, #tpu.memory_space<vmem>>, %arg13: memref<2x2x16xf32, #tpu.memory_space<vmem>>, %arg14: memref<15x64xf32, #tpu.memory_space<vmem>>, %arg15: memref<64x64xf32, #tpu.memory_space<vmem>>, %arg16: memref<16x16xf32, #tpu.memory_space<vmem>>) attributes {dimension_semantics = [], scalar_prefetch = 0 : i64, scratch_operands = 3 : i64, tpu.core_type = #tpu.core_type<tc>} {
    %c0 = arith.constant 0 : index
    %c0_0 = arith.constant 0 : index
    %0 = vector.load %arg3[%c0, %c0_0] : memref<15x32xf32, #tpu.memory_space<vmem>>, vector<15x32xf32>
    %c0_1 = arith.constant 0 : index
    %c0_2 = arith.constant 0 : index
    %1 = vector.load %arg4[%c0_1, %c0_2] : memref<32x64xf32, #tpu.memory_space<vmem>>, vector<32x64xf32>
    %cst = arith.constant dense<0.000000e+00> : vector<15x64xf32>
    %2 = tpu.matmul %0, %1, %cst {dimension_numbers = #tpu.dot_dimension_numbers<[1], [0], [0], [1], [0, 0, 1, 1], [], []>} : vector<15x32xf32>, vector<32x64xf32>, vector<15x64xf32> -> vector<15x64xf32>
    %c0_3 = arith.constant 0 : index
    %c0_4 = arith.constant 0 : index
    %3 = vector.load %arg5[%c0_3, %c0_4] : memref<1x64xf32, #tpu.memory_space<vmem>>, vector<1x64xf32>
    %4 = vector.broadcast %3 : vector<1x64xf32> to vector<15x64xf32>
    %5 = arith.addf %2, %4 : vector<15x64xf32>
    %c0_5 = arith.constant 0 : index
    %c0_6 = arith.constant 0 : index
    %6 = vector.load %arg14[%c0_5, %c0_6] : memref<15x64xf32, #tpu.memory_space<vmem>>, vector<15x64xf32>
    tpu.vector_store %arg14[%c0_5, %c0_6], %5 {strides = array<i32>} : memref<15x64xf32, #tpu.memory_space<vmem>>, vector<15x64xf32>,
    %cst_7 = arith.constant 0.000000e+00 : f32
    %7 = vector.broadcast %cst_7 : f32 to vector<64x64xf32>
    %c0_8 = arith.constant 0 : index
    %c0_9 = arith.constant 0 : index
    %8 = vector.load %arg15[%c0_8, %c0_9] : memref<64x64xf32, #tpu.memory_space<vmem>>, vector<64x64xf32>
    tpu.vector_store %arg15[%c0_8, %c0_9], %7 {strides = array<i32>} : memref<64x64xf32, #tpu.memory_space<vmem>>, vector<64x64xf32>,
    %c0_10 = arith.constant 0 : index
    %9 = memref.load %arg0[%c0_10] : memref<16xi32, #tpu.memory_space<smem>>
    %10 = arith.index_cast %9 : i32 to index
    %c0_11 = arith.constant 0 : index
    %11 = vector.load %arg14[%10, %c0_11] : memref<15x64xf32, #tpu.memory_space<vmem>>, vector<1x64xf32>
    %c0_12 = arith.constant 0 : index
    %c0_13 = arith.constant 0 : index
    %12 = vector.load %arg15[%c0_12, %c0_13] : memref<64x64xf32, #tpu.memory_space<vmem>>, vector<1x64xf32>
    tpu.vector_store %arg15[%c0_12, %c0_13], %11 {strides = array<i32>} : memref<64x64xf32, #tpu.memory_space<vmem>>, vector<1x64xf32>,
    %c8 = arith.constant 8 : index
    %13 = memref.load %arg0[%c8] : memref<16xi32, #tpu.memory_space<smem>>
    %14 = arith.index_cast %13 : i32 to index
    %c0_14 = arith.constant 0 : index
    %15 = vector.load %arg14[%14, %c0_14] : memref<15x64xf32, #tpu.memory_space<vmem>>, vector<1x64xf32>
    %c1 = arith.constant 1 : index
    %c0_15 = arith.constant 0 : index
    %16 = vector.load %arg15[%c1, %c0_15] : memref<64x64xf32, #tpu.memory_space<vmem>>, vector<1x64xf32>
    tpu.vector_store %arg15[%c1, %c0_15], %15 {strides = array<i32>} : memref<64x64xf32, #tpu.memory_space<vmem>>, vector<1x64xf32>,
    %c1_16 = arith.constant 1 : index
    %17 = memref.load %arg0[%c1_16] : memref<16xi32, #tpu.memory_space<smem>>
    %18 = arith.index_cast %17 : i32 to index
    %c0_17 = arith.constant 0 : index
    %19 = vector.load %arg14[%18, %c0_17] : memref<15x64xf32, #tpu.memory_space<vmem>>, vector<1x64xf32>
    %c8_18 = arith.constant 8 : index
    %c0_19 = arith.constant 0 : index
    %20 = vector.load %arg15[%c8_18, %c0_19] : memref<64x64xf32, #tpu.memory_space<vmem>>, vector<1x64xf32>
    tpu.vector_store %arg15[%c8_18, %c0_19], %19 {strides = array<i32>} : memref<64x64xf32, #tpu.memory_space<vmem>>, vector<1x64xf32>,
    %c9 = arith.constant 9 : index
    %21 = memref.load %arg0[%c9] : memref<16xi32, #tpu.memory_space<smem>>
    %22 = arith.index_cast %21 : i32 to index
    %c0_20 = arith.constant 0 : index
    %23 = vector.load %arg14[%22, %c0_20] : memref<15x64xf32, #tpu.memory_space<vmem>>, vector<1x64xf32>
    %c9_21 = arith.constant 9 : index
    %c0_22 = arith.constant 0 : index
    %24 = vector.load %arg15[%c9_21, %c0_22] : memref<64x64xf32, #tpu.memory_space<vmem>>, vector<1x64xf32>
    tpu.vector_store %arg15[%c9_21, %c0_22], %23 {strides = array<i32>} : memref<64x64xf32, #tpu.memory_space<vmem>>, vector<1x64xf32>,
    %c2 = arith.constant 2 : index
    %25 = memref.load %arg0[%c2] : memref<16xi32, #tpu.memory_space<smem>>
    %26 = arith.index_cast %25 : i32 to index
    %c0_23 = arith.constant 0 : index
    %27 = vector.load %arg14[%26, %c0_23] : memref<15x64xf32, #tpu.memory_space<vmem>>, vector<1x64xf32>
    %c16 = arith.constant 16 : index
    %c0_24 = arith.constant 0 : index
    %28 = vector.load %arg15[%c16, %c0_24] : memref<64x64xf32, #tpu.memory_space<vmem>>, vector<1x64xf32>
    tpu.vector_store %arg15[%c16, %c0_24], %27 {strides = array<i32>} : memref<64x64xf32, #tpu.memory_space<vmem>>, vector<1x64xf32>,
    %c10 = arith.constant 10 : index
    %29 = memref.load %arg0[%c10] : memref<16xi32, #tpu.memory_space<smem>>
    %30 = arith.index_cast %29 : i32 to index
    %c0_25 = arith.constant 0 : index
    %31 = vector.load %arg14[%30, %c0_25] : memref<15x64xf32, #tpu.memory_space<vmem>>, vector<1x64xf32>
    %c17 = arith.constant 17 : index
    %c0_26 = arith.constant 0 : index
    %32 = vector.load %arg15[%c17, %c0_26] : memref<64x64xf32, #tpu.memory_space<vmem>>, vector<1x64xf32>
    tpu.vector_store %arg15[%c17, %c0_26], %31 {strides = array<i32>} : memref<64x64xf32, #tpu.memory_space<vmem>>, vector<1x64xf32>,
    %c3 = arith.constant 3 : index
    %33 = memref.load %arg0[%c3] : memref<16xi32, #tpu.memory_space<smem>>
    %34 = arith.index_cast %33 : i32 to index
    %c0_27 = arith.constant 0 : index
    %35 = vector.load %arg14[%34, %c0_27] : memref<15x64xf32, #tpu.memory_space<vmem>>, vector<1x64xf32>
    %c24 = arith.constant 24 : index
    %c0_28 = arith.constant 0 : index
    %36 = vector.load %arg15[%c24, %c0_28] : memref<64x64xf32, #tpu.memory_space<vmem>>, vector<1x64xf32>
    tpu.vector_store %arg15[%c24, %c0_28], %35 {strides = array<i32>} : memref<64x64xf32, #tpu.memory_space<vmem>>, vector<1x64xf32>,
    %c11 = arith.constant 11 : index
    %37 = memref.load %arg0[%c11] : memref<16xi32, #tpu.memory_space<smem>>
    %38 = arith.index_cast %37 : i32 to index
    %c0_29 = arith.constant 0 : index
    %39 = vector.load %arg14[%38, %c0_29] : memref<15x64xf32, #tpu.memory_space<vmem>>, vector<1x64xf32>
    %c25 = arith.constant 25 : index
    %c0_30 = arith.constant 0 : index
    %40 = vector.load %arg15[%c25, %c0_30] : memref<64x64xf32, #tpu.memory_space<vmem>>, vector<1x64xf32>
    tpu.vector_store %arg15[%c25, %c0_30], %39 {strides = array<i32>} : memref<64x64xf32, #tpu.memory_space<vmem>>, vector<1x64xf32>,
    %c4 = arith.constant 4 : index
    %41 = memref.load %arg0[%c4] : memref<16xi32, #tpu.memory_space<smem>>
    %42 = arith.index_cast %41 : i32 to index
    %c0_31 = arith.constant 0 : index
    %43 = vector.load %arg14[%42, %c0_31] : memref<15x64xf32, #tpu.memory_space<vmem>>, vector<1x64xf32>
    %c32 = arith.constant 32 : index
    %c0_32 = arith.constant 0 : index
    %44 = vector.load %arg15[%c32, %c0_32] : memref<64x64xf32, #tpu.memory_space<vmem>>, vector<1x64xf32>
    tpu.vector_store %arg15[%c32, %c0_32], %43 {strides = array<i32>} : memref<64x64xf32, #tpu.memory_space<vmem>>, vector<1x64xf32>,
    %c12 = arith.constant 12 : index
    %45 = memref.load %arg0[%c12] : memref<16xi32, #tpu.memory_space<smem>>
    %46 = arith.index_cast %45 : i32 to index
    %c0_33 = arith.constant 0 : index
    %47 = vector.load %arg14[%46, %c0_33] : memref<15x64xf32, #tpu.memory_space<vmem>>, vector<1x64xf32>
    %c33 = arith.constant 33 : index
    %c0_34 = arith.constant 0 : index
    %48 = vector.load %arg15[%c33, %c0_34] : memref<64x64xf32, #tpu.memory_space<vmem>>, vector<1x64xf32>
    tpu.vector_store %arg15[%c33, %c0_34], %47 {strides = array<i32>} : memref<64x64xf32, #tpu.memory_space<vmem>>, vector<1x64xf32>,
    %c5 = arith.constant 5 : index
    %49 = memref.load %arg0[%c5] : memref<16xi32, #tpu.memory_space<smem>>
    %50 = arith.index_cast %49 : i32 to index
    %c0_35 = arith.constant 0 : index
    %51 = vector.load %arg14[%50, %c0_35] : memref<15x64xf32, #tpu.memory_space<vmem>>, vector<1x64xf32>
    %c40 = arith.constant 40 : index
    %c0_36 = arith.constant 0 : index
    %52 = vector.load %arg15[%c40, %c0_36] : memref<64x64xf32, #tpu.memory_space<vmem>>, vector<1x64xf32>
    tpu.vector_store %arg15[%c40, %c0_36], %51 {strides = array<i32>} : memref<64x64xf32, #tpu.memory_space<vmem>>, vector<1x64xf32>,
    %c13 = arith.constant 13 : index
    %53 = memref.load %arg0[%c13] : memref<16xi32, #tpu.memory_space<smem>>
    %54 = arith.index_cast %53 : i32 to index
    %c0_37 = arith.constant 0 : index
    %55 = vector.load %arg14[%54, %c0_37] : memref<15x64xf32, #tpu.memory_space<vmem>>, vector<1x64xf32>
    %c41 = arith.constant 41 : index
    %c0_38 = arith.constant 0 : index
    %56 = vector.load %arg15[%c41, %c0_38] : memref<64x64xf32, #tpu.memory_space<vmem>>, vector<1x64xf32>
    tpu.vector_store %arg15[%c41, %c0_38], %55 {strides = array<i32>} : memref<64x64xf32, #tpu.memory_space<vmem>>, vector<1x64xf32>,
    %c6 = arith.constant 6 : index
    %57 = memref.load %arg0[%c6] : memref<16xi32, #tpu.memory_space<smem>>
    %58 = arith.index_cast %57 : i32 to index
    %c0_39 = arith.constant 0 : index
    %59 = vector.load %arg14[%58, %c0_39] : memref<15x64xf32, #tpu.memory_space<vmem>>, vector<1x64xf32>
    %c48 = arith.constant 48 : index
    %c0_40 = arith.constant 0 : index
    %60 = vector.load %arg15[%c48, %c0_40] : memref<64x64xf32, #tpu.memory_space<vmem>>, vector<1x64xf32>
    tpu.vector_store %arg15[%c48, %c0_40], %59 {strides = array<i32>} : memref<64x64xf32, #tpu.memory_space<vmem>>, vector<1x64xf32>,
    %c14 = arith.constant 14 : index
    %61 = memref.load %arg0[%c14] : memref<16xi32, #tpu.memory_space<smem>>
    %62 = arith.index_cast %61 : i32 to index
    %c0_41 = arith.constant 0 : index
    %63 = vector.load %arg14[%62, %c0_41] : memref<15x64xf32, #tpu.memory_space<vmem>>, vector<1x64xf32>
    %c49 = arith.constant 49 : index
    %c0_42 = arith.constant 0 : index
    %64 = vector.load %arg15[%c49, %c0_42] : memref<64x64xf32, #tpu.memory_space<vmem>>, vector<1x64xf32>
    tpu.vector_store %arg15[%c49, %c0_42], %63 {strides = array<i32>} : memref<64x64xf32, #tpu.memory_space<vmem>>, vector<1x64xf32>,
    %c7 = arith.constant 7 : index
    %65 = memref.load %arg0[%c7] : memref<16xi32, #tpu.memory_space<smem>>
    %66 = arith.index_cast %65 : i32 to index
    %c0_43 = arith.constant 0 : index
    %67 = vector.load %arg14[%66, %c0_43] : memref<15x64xf32, #tpu.memory_space<vmem>>, vector<1x64xf32>
    %c56 = arith.constant 56 : index
    %c0_44 = arith.constant 0 : index
    %68 = vector.load %arg15[%c56, %c0_44] : memref<64x64xf32, #tpu.memory_space<vmem>>, vector<1x64xf32>
    tpu.vector_store %arg15[%c56, %c0_44], %67 {strides = array<i32>} : memref<64x64xf32, #tpu.memory_space<vmem>>, vector<1x64xf32>,
    %c15 = arith.constant 15 : index
    %69 = memref.load %arg0[%c15] : memref<16xi32, #tpu.memory_space<smem>>
    %70 = arith.index_cast %69 : i32 to index
    %c0_45 = arith.constant 0 : index
    %71 = vector.load %arg14[%70, %c0_45] : memref<15x64xf32, #tpu.memory_space<vmem>>, vector<1x64xf32>
    %c57 = arith.constant 57 : index
    %c0_46 = arith.constant 0 : index
    %72 = vector.load %arg15[%c57, %c0_46] : memref<64x64xf32, #tpu.memory_space<vmem>>, vector<1x64xf32>
    tpu.vector_store %arg15[%c57, %c0_46], %71 {strides = array<i32>} : memref<64x64xf32, #tpu.memory_space<vmem>>, vector<1x64xf32>,
    %c0_47 = arith.constant 0 : index
    %c0_48 = arith.constant 0 : index
    %73 = vector.load %arg6[%c0_47, %c0_48] : memref<16x64xf32, #tpu.memory_space<vmem>>, vector<16x64xf32>
    %74 = arith.truncf %73 : vector<16x64xf32> to vector<16x64xbf16>
    %c0_49 = arith.constant 0 : index
    %c0_50 = arith.constant 0 : index
    %75 = vector.load %arg7[%c0_49, %c0_50] : memref<32x64xf32, #tpu.memory_space<vmem>>, vector<32x64xf32>
    %76 = arith.truncf %75 : vector<32x64xf32> to vector<32x64xbf16>
    %c0_51 = arith.constant 0 : index
    %c0_52 = arith.constant 0 : index
    %77 = vector.load %arg8[%c0_51, %c0_52] : memref<1x64xf32, #tpu.memory_space<vmem>>, vector<1x64xf32>
    %78 = vector.shape_cast %77 : vector<1x64xf32> to vector<1x64xf32>
    %79 = vector.broadcast %78 : vector<1x64xf32> to vector<8x64xf32>
    %c0_53 = arith.constant 0 : index
    %c0_54 = arith.constant 0 : index
    %c0_55 = arith.constant 0 : index
    %80 = vector.load %arg1[%c0_53, %c0_54, %c0_55] : memref<2x8x16xf32, #tpu.memory_space<vmem>>, vector<1x8x16xf32>
    %81 = vector.shape_cast %80 : vector<1x8x16xf32> to vector<8x16xf32>
    %c0_56 = arith.constant 0 : index
    %c0_57 = arith.constant 0 : index
    %c0_58 = arith.constant 0 : index
    %82 = vector.load %arg2[%c0_56, %c0_57, %c0_58] : memref<2x8x16xf32, #tpu.memory_space<vmem>>, vector<1x8x16xf32>
    %83 = vector.shape_cast %82 : vector<1x8x16xf32> to vector<8x16xf32>
    %c1_59 = arith.constant 1 : index
    %c0_60 = arith.constant 0 : index
    %c0_61 = arith.constant 0 : index
    %84 = vector.load %arg1[%c1_59, %c0_60, %c0_61] : memref<2x8x16xf32, #tpu.memory_space<vmem>>, vector<1x8x16xf32>
    %85 = vector.shape_cast %84 : vector<1x8x16xf32> to vector<8x16xf32>
    %c1_62 = arith.constant 1 : index
    %c0_63 = arith.constant 0 : index
    %c0_64 = arith.constant 0 : index
    %86 = vector.load %arg2[%c1_62, %c0_63, %c0_64] : memref<2x8x16xf32, #tpu.memory_space<vmem>>, vector<1x8x16xf32>
    %87 = vector.shape_cast %86 : vector<1x8x16xf32> to vector<8x16xf32>
    %c0_65 = arith.constant 0 : index
    %c0_66 = arith.constant 0 : index
    %88 = vector.load %arg15[%c0_65, %c0_66] : memref<64x64xf32, #tpu.memory_space<vmem>>, vector<8x64xf32>
    %89 = arith.truncf %81 : vector<8x16xf32> to vector<8x16xbf16>
    %cst_67 = arith.constant dense<0.000000e+00> : vector<8x64xf32>
    %90 = tpu.matmul %89, %74, %cst_67 {dimension_numbers = #tpu.dot_dimension_numbers<[1], [0], [0], [1], [0, 0, 1, 1], [], []>} : vector<8x16xbf16>, vector<16x64xbf16>, vector<8x64xf32> -> vector<8x64xf32>
    %91 = arith.addf %88, %90 : vector<8x64xf32>
    %92 = vector.extract_strided_slice %91 {offsets = [0, 0], sizes = [8, 48], strides = [1, 1]} : vector<8x64xf32> to vector<8x48xf32>
    %93 = arith.negf %92 : vector<8x48xf32>
    %94 = math.exp %93 : vector<8x48xf32>
    %cst_68 = arith.constant 1.000000e+00 : f32
    %95 = vector.broadcast %cst_68 : f32 to vector<8x48xf32>
    %96 = arith.addf %95, %94 : vector<8x48xf32>
    %97 = arith.divf %95, %96 : vector<8x48xf32>
    %98 = vector.extract_strided_slice %91 {offsets = [0, 48], sizes = [8, 16], strides = [1, 1]} : vector<8x64xf32> to vector<8x16xf32>
    %99 = math.tanh %98 : vector<8x16xf32>
    %100 = vector.extract_strided_slice %97 {offsets = [0, 0], sizes = [8, 16], strides = [1, 1]} : vector<8x48xf32> to vector<8x16xf32>
    %101 = vector.extract_strided_slice %97 {offsets = [0, 16], sizes = [8, 16], strides = [1, 1]} : vector<8x48xf32> to vector<8x16xf32>
    %102 = vector.extract_strided_slice %97 {offsets = [0, 32], sizes = [8, 16], strides = [1, 1]} : vector<8x48xf32> to vector<8x16xf32>
    %103 = arith.mulf %101, %83 : vector<8x16xf32>
    %104 = arith.mulf %100, %99 : vector<8x16xf32>
    %105 = arith.addf %103, %104 : vector<8x16xf32>
    %106 = math.tanh %105 : vector<8x16xf32>
    %107 = arith.mulf %102, %106 : vector<8x16xf32>
    %108 = tpu.concatenate %107, %85 in 1 : vector<8x16xf32>, vector<8x16xf32> -> vector<8x32xf32>
    %109 = arith.truncf %108 : vector<8x32xf32> to vector<8x32xbf16>
    %cst_69 = arith.constant dense<0.000000e+00> : vector<8x64xf32>
    %110 = tpu.matmul %109, %76, %cst_69 {dimension_numbers = #tpu.dot_dimension_numbers<[1], [0], [0], [1], [0, 0, 1, 1], [], []>} : vector<8x32xbf16>, vector<32x64xbf16>, vector<8x64xf32> -> vector<8x64xf32>
    %111 = arith.addf %110, %79 : vector<8x64xf32>
    %112 = vector.extract_strided_slice %111 {offsets = [0, 0], sizes = [8, 48], strides = [1, 1]} : vector<8x64xf32> to vector<8x48xf32>
    %113 = arith.negf %112 : vector<8x48xf32>
    %114 = math.exp %113 : vector<8x48xf32>
    %cst_70 = arith.constant 1.000000e+00 : f32
    %115 = vector.broadcast %cst_70 : f32 to vector<8x48xf32>
    %116 = arith.addf %115, %114 : vector<8x48xf32>
    %117 = arith.divf %115, %116 : vector<8x48xf32>
    %118 = vector.extract_strided_slice %111 {offsets = [0, 48], sizes = [8, 16], strides = [1, 1]} : vector<8x64xf32> to vector<8x16xf32>
    %119 = math.tanh %118 : vector<8x16xf32>
    %120 = vector.extract_strided_slice %117 {offsets = [0, 0], sizes = [8, 16], strides = [1, 1]} : vector<8x48xf32> to vector<8x16xf32>
    %121 = vector.extract_strided_slice %117 {offsets = [0, 16], sizes = [8, 16], strides = [1, 1]} : vector<8x48xf32> to vector<8x16xf32>
    %122 = vector.extract_strided_slice %117 {offsets = [0, 32], sizes = [8, 16], strides = [1, 1]} : vector<8x48xf32> to vector<8x16xf32>
    %123 = arith.mulf %121, %87 : vector<8x16xf32>
    %124 = arith.mulf %120, %119 : vector<8x16xf32>
    %125 = arith.addf %123, %124 : vector<8x16xf32>
    %126 = math.tanh %125 : vector<8x16xf32>
    %127 = arith.mulf %122, %126 : vector<8x16xf32>
    %128 = vector.extract_strided_slice %127 {offsets = [0, 0], sizes = [1, 16], strides = [1, 1]} : vector<8x16xf32> to vector<1x16xf32>
    %c0_71 = arith.constant 0 : index
    %c0_72 = arith.constant 0 : index
    %129 = vector.load %arg16[%c0_71, %c0_72] : memref<16x16xf32, #tpu.memory_space<vmem>>, vector<1x16xf32>
    tpu.vector_store %arg16[%c0_71, %c0_72], %128 {strides = array<i32>} : memref<16x16xf32, #tpu.memory_space<vmem>>, vector<1x16xf32>,
    %130 = vector.extract_strided_slice %127 {offsets = [1, 0], sizes = [1, 16], strides = [1, 1]} : vector<8x16xf32> to vector<1x16xf32>
    %c8_73 = arith.constant 8 : index
    %c0_74 = arith.constant 0 : index
    %131 = vector.load %arg16[%c8_73, %c0_74] : memref<16x16xf32, #tpu.memory_space<vmem>>, vector<1x16xf32>
    tpu.vector_store %arg16[%c8_73, %c0_74], %130 {strides = array<i32>} : memref<16x16xf32, #tpu.memory_space<vmem>>, vector<1x16xf32>,
    %c8_75 = arith.constant 8 : index
    %c0_76 = arith.constant 0 : index
    %132 = vector.load %arg15[%c8_75, %c0_76] : memref<64x64xf32, #tpu.memory_space<vmem>>, vector<8x64xf32>
    %133 = arith.truncf %107 : vector<8x16xf32> to vector<8x16xbf16>
    %cst_77 = arith.constant dense<0.000000e+00> : vector<8x64xf32>
    %134 = tpu.matmul %133, %74, %cst_77 {dimension_numbers = #tpu.dot_dimension_numbers<[1], [0], [0], [1], [0, 0, 1, 1], [], []>} : vector<8x16xbf16>, vector<16x64xbf16>, vector<8x64xf32> -> vector<8x64xf32>
    %135 = arith.addf %132, %134 : vector<8x64xf32>
    %136 = vector.extract_strided_slice %135 {offsets = [0, 0], sizes = [8, 48], strides = [1, 1]} : vector<8x64xf32> to vector<8x48xf32>
    %137 = arith.negf %136 : vector<8x48xf32>
    %138 = math.exp %137 : vector<8x48xf32>
    %cst_78 = arith.constant 1.000000e+00 : f32
    %139 = vector.broadcast %cst_78 : f32 to vector<8x48xf32>
    %140 = arith.addf %139, %138 : vector<8x48xf32>
    %141 = arith.divf %139, %140 : vector<8x48xf32>
    %142 = vector.extract_strided_slice %135 {offsets = [0, 48], sizes = [8, 16], strides = [1, 1]} : vector<8x64xf32> to vector<8x16xf32>
    %143 = math.tanh %142 : vector<8x16xf32>
    %144 = vector.extract_strided_slice %141 {offsets = [0, 0], sizes = [8, 16], strides = [1, 1]} : vector<8x48xf32> to vector<8x16xf32>
    %145 = vector.extract_strided_slice %141 {offsets = [0, 16], sizes = [8, 16], strides = [1, 1]} : vector<8x48xf32> to vector<8x16xf32>
    %146 = vector.extract_strided_slice %141 {offsets = [0, 32], sizes = [8, 16], strides = [1, 1]} : vector<8x48xf32> to vector<8x16xf32>
    %147 = arith.mulf %145, %105 : vector<8x16xf32>
    %148 = arith.mulf %144, %143 : vector<8x16xf32>
    %149 = arith.addf %147, %148 : vector<8x16xf32>
    %150 = math.tanh %149 : vector<8x16xf32>
    %151 = arith.mulf %146, %150 : vector<8x16xf32>
    %152 = tpu.concatenate %151, %127 in 1 : vector<8x16xf32>, vector<8x16xf32> -> vector<8x32xf32>
    %153 = arith.truncf %152 : vector<8x32xf32> to vector<8x32xbf16>
    %cst_79 = arith.constant dense<0.000000e+00> : vector<8x64xf32>
    %154 = tpu.matmul %153, %76, %cst_79 {dimension_numbers = #tpu.dot_dimension_numbers<[1], [0], [0], [1], [0, 0, 1, 1], [], []>} : vector<8x32xbf16>, vector<32x64xbf16>, vector<8x64xf32> -> vector<8x64xf32>
    %155 = arith.addf %154, %79 : vector<8x64xf32>
    %156 = vector.extract_strided_slice %155 {offsets = [0, 0], sizes = [8, 48], strides = [1, 1]} : vector<8x64xf32> to vector<8x48xf32>
    %157 = arith.negf %156 : vector<8x48xf32>
    %158 = math.exp %157 : vector<8x48xf32>
    %cst_80 = arith.constant 1.000000e+00 : f32
    %159 = vector.broadcast %cst_80 : f32 to vector<8x48xf32>
    %160 = arith.addf %159, %158 : vector<8x48xf32>
    %161 = arith.divf %159, %160 : vector<8x48xf32>
    %162 = vector.extract_strided_slice %155 {offsets = [0, 48], sizes = [8, 16], strides = [1, 1]} : vector<8x64xf32> to vector<8x16xf32>
    %163 = math.tanh %162 : vector<8x16xf32>
    %164 = vector.extract_strided_slice %161 {offsets = [0, 0], sizes = [8, 16], strides = [1, 1]} : vector<8x48xf32> to vector<8x16xf32>
    %165 = vector.extract_strided_slice %161 {offsets = [0, 16], sizes = [8, 16], strides = [1, 1]} : vector<8x48xf32> to vector<8x16xf32>
    %166 = vector.extract_strided_slice %161 {offsets = [0, 32], sizes = [8, 16], strides = [1, 1]} : vector<8x48xf32> to vector<8x16xf32>
    %167 = arith.mulf %165, %125 : vector<8x16xf32>
    %168 = arith.mulf %164, %163 : vector<8x16xf32>
    %169 = arith.addf %167, %168 : vector<8x16xf32>
    %170 = math.tanh %169 : vector<8x16xf32>
    %171 = arith.mulf %166, %170 : vector<8x16xf32>
    %172 = vector.extract_strided_slice %171 {offsets = [0, 0], sizes = [1, 16], strides = [1, 1]} : vector<8x16xf32> to vector<1x16xf32>
    %c1_81 = arith.constant 1 : index
    %c0_82 = arith.constant 0 : index
    %173 = vector.load %arg16[%c1_81, %c0_82] : memref<16x16xf32, #tpu.memory_space<vmem>>, vector<1x16xf32>
    tpu.vector_store %arg16[%c1_81, %c0_82], %172 {strides = array<i32>} : memref<16x16xf32, #tpu.memory_space<vmem>>, vector<1x16xf32>,
    %174 = vector.extract_strided_slice %171 {offsets = [1, 0], sizes = [1, 16], strides = [1, 1]} : vector<8x16xf32> to vector<1x16xf32>
    %c9_83 = arith.constant 9 : index
    %c0_84 = arith.constant 0 : index
    %175 = vector.load %arg16[%c9_83, %c0_84] : memref<16x16xf32, #tpu.memory_space<vmem>>, vector<1x16xf32>
    tpu.vector_store %arg16[%c9_83, %c0_84], %174 {strides = array<i32>} : memref<16x16xf32, #tpu.memory_space<vmem>>, vector<1x16xf32>,
    %c16_85 = arith.constant 16 : index
    %c0_86 = arith.constant 0 : index
    %176 = vector.load %arg15[%c16_85, %c0_86] : memref<64x64xf32, #tpu.memory_space<vmem>>, vector<8x64xf32>
    %177 = arith.truncf %151 : vector<8x16xf32> to vector<8x16xbf16>
    %cst_87 = arith.constant dense<0.000000e+00> : vector<8x64xf32>
    %178 = tpu.matmul %177, %74, %cst_87 {dimension_numbers = #tpu.dot_dimension_numbers<[1], [0], [0], [1], [0, 0, 1, 1], [], []>} : vector<8x16xbf16>, vector<16x64xbf16>, vector<8x64xf32> -> vector<8x64xf32>
    %179 = arith.addf %176, %178 : vector<8x64xf32>
    %180 = vector.extract_strided_slice %179 {offsets = [0, 0], sizes = [8, 48], strides = [1, 1]} : vector<8x64xf32> to vector<8x48xf32>
    %181 = arith.negf %180 : vector<8x48xf32>
    %182 = math.exp %181 : vector<8x48xf32>
    %cst_88 = arith.constant 1.000000e+00 : f32
    %183 = vector.broadcast %cst_88 : f32 to vector<8x48xf32>
    %184 = arith.addf %183, %182 : vector<8x48xf32>
    %185 = arith.divf %183, %184 : vector<8x48xf32>
    %186 = vector.extract_strided_slice %179 {offsets = [0, 48], sizes = [8, 16], strides = [1, 1]} : vector<8x64xf32> to vector<8x16xf32>
    %187 = math.tanh %186 : vector<8x16xf32>
    %188 = vector.extract_strided_slice %185 {offsets = [0, 0], sizes = [8, 16], strides = [1, 1]} : vector<8x48xf32> to vector<8x16xf32>
    %189 = vector.extract_strided_slice %185 {offsets = [0, 16], sizes = [8, 16], strides = [1, 1]} : vector<8x48xf32> to vector<8x16xf32>
    %190 = vector.extract_strided_slice %185 {offsets = [0, 32], sizes = [8, 16], strides = [1, 1]} : vector<8x48xf32> to vector<8x16xf32>
    %191 = arith.mulf %189, %149 : vector<8x16xf32>
    %192 = arith.mulf %188, %187 : vector<8x16xf32>
    %193 = arith.addf %191, %192 : vector<8x16xf32>
    %194 = math.tanh %193 : vector<8x16xf32>
    %195 = arith.mulf %190, %194 : vector<8x16xf32>
    %196 = tpu.concatenate %195, %171 in 1 : vector<8x16xf32>, vector<8x16xf32> -> vector<8x32xf32>
    %197 = arith.truncf %196 : vector<8x32xf32> to vector<8x32xbf16>
    %cst_89 = arith.constant dense<0.000000e+00> : vector<8x64xf32>
    %198 = tpu.matmul %197, %76, %cst_89 {dimension_numbers = #tpu.dot_dimension_numbers<[1], [0], [0], [1], [0, 0, 1, 1], [], []>} : vector<8x32xbf16>, vector<32x64xbf16>, vector<8x64xf32> -> vector<8x64xf32>
    %199 = arith.addf %198, %79 : vector<8x64xf32>
    %200 = vector.extract_strided_slice %199 {offsets = [0, 0], sizes = [8, 48], strides = [1, 1]} : vector<8x64xf32> to vector<8x48xf32>
    %201 = arith.negf %200 : vector<8x48xf32>
    %202 = math.exp %201 : vector<8x48xf32>
    %cst_90 = arith.constant 1.000000e+00 : f32
    %203 = vector.broadcast %cst_90 : f32 to vector<8x48xf32>
    %204 = arith.addf %203, %202 : vector<8x48xf32>
    %205 = arith.divf %203, %204 : vector<8x48xf32>
    %206 = vector.extract_strided_slice %199 {offsets = [0, 48], sizes = [8, 16], strides = [1, 1]} : vector<8x64xf32> to vector<8x16xf32>
    %207 = math.tanh %206 : vector<8x16xf32>
    %208 = vector.extract_strided_slice %205 {offsets = [0, 0], sizes = [8, 16], strides = [1, 1]} : vector<8x48xf32> to vector<8x16xf32>
    %209 = vector.extract_strided_slice %205 {offsets = [0, 16], sizes = [8, 16], strides = [1, 1]} : vector<8x48xf32> to vector<8x16xf32>
    %210 = vector.extract_strided_slice %205 {offsets = [0, 32], sizes = [8, 16], strides = [1, 1]} : vector<8x48xf32> to vector<8x16xf32>
    %211 = arith.mulf %209, %169 : vector<8x16xf32>
    %212 = arith.mulf %208, %207 : vector<8x16xf32>
    %213 = arith.addf %211, %212 : vector<8x16xf32>
    %214 = math.tanh %213 : vector<8x16xf32>
    %215 = arith.mulf %210, %214 : vector<8x16xf32>
    %216 = vector.extract_strided_slice %215 {offsets = [0, 0], sizes = [1, 16], strides = [1, 1]} : vector<8x16xf32> to vector<1x16xf32>
    %c2_91 = arith.constant 2 : index
    %c0_92 = arith.constant 0 : index
    %217 = vector.load %arg16[%c2_91, %c0_92] : memref<16x16xf32, #tpu.memory_space<vmem>>, vector<1x16xf32>
    tpu.vector_store %arg16[%c2_91, %c0_92], %216 {strides = array<i32>} : memref<16x16xf32, #tpu.memory_space<vmem>>, vector<1x16xf32>,
    %218 = vector.extract_strided_slice %215 {offsets = [1, 0], sizes = [1, 16], strides = [1, 1]} : vector<8x16xf32> to vector<1x16xf32>
    %c10_93 = arith.constant 10 : index
    %c0_94 = arith.constant 0 : index
    %219 = vector.load %arg16[%c10_93, %c0_94] : memref<16x16xf32, #tpu.memory_space<vmem>>, vector<1x16xf32>
    tpu.vector_store %arg16[%c10_93, %c0_94], %218 {strides = array<i32>} : memref<16x16xf32, #tpu.memory_space<vmem>>, vector<1x16xf32>,
    %c24_95 = arith.constant 24 : index
    %c0_96 = arith.constant 0 : index
    %220 = vector.load %arg15[%c24_95, %c0_96] : memref<64x64xf32, #tpu.memory_space<vmem>>, vector<8x64xf32>
    %221 = arith.truncf %195 : vector<8x16xf32> to vector<8x16xbf16>
    %cst_97 = arith.constant dense<0.000000e+00> : vector<8x64xf32>
    %222 = tpu.matmul %221, %74, %cst_97 {dimension_numbers = #tpu.dot_dimension_numbers<[1], [0], [0], [1], [0, 0, 1, 1], [], []>} : vector<8x16xbf16>, vector<16x64xbf16>, vector<8x64xf32> -> vector<8x64xf32>
    %223 = arith.addf %220, %222 : vector<8x64xf32>
    %224 = vector.extract_strided_slice %223 {offsets = [0, 0], sizes = [8, 48], strides = [1, 1]} : vector<8x64xf32> to vector<8x48xf32>
    %225 = arith.negf %224 : vector<8x48xf32>
    %226 = math.exp %225 : vector<8x48xf32>
    %cst_98 = arith.constant 1.000000e+00 : f32
    %227 = vector.broadcast %cst_98 : f32 to vector<8x48xf32>
    %228 = arith.addf %227, %226 : vector<8x48xf32>
    %229 = arith.divf %227, %228 : vector<8x48xf32>
    %230 = vector.extract_strided_slice %223 {offsets = [0, 48], sizes = [8, 16], strides = [1, 1]} : vector<8x64xf32> to vector<8x16xf32>
    %231 = math.tanh %230 : vector<8x16xf32>
    %232 = vector.extract_strided_slice %229 {offsets = [0, 0], sizes = [8, 16], strides = [1, 1]} : vector<8x48xf32> to vector<8x16xf32>
    %233 = vector.extract_strided_slice %229 {offsets = [0, 16], sizes = [8, 16], strides = [1, 1]} : vector<8x48xf32> to vector<8x16xf32>
    %234 = vector.extract_strided_slice %229 {offsets = [0, 32], sizes = [8, 16], strides = [1, 1]} : vector<8x48xf32> to vector<8x16xf32>
    %235 = arith.mulf %233, %193 : vector<8x16xf32>
    %236 = arith.mulf %232, %231 : vector<8x16xf32>
    %237 = arith.addf %235, %236 : vector<8x16xf32>
    %238 = math.tanh %237 : vector<8x16xf32>
    %239 = arith.mulf %234, %238 : vector<8x16xf32>
    %240 = tpu.concatenate %239, %215 in 1 : vector<8x16xf32>, vector<8x16xf32> -> vector<8x32xf32>
    %241 = arith.truncf %240 : vector<8x32xf32> to vector<8x32xbf16>
    %cst_99 = arith.constant dense<0.000000e+00> : vector<8x64xf32>
    %242 = tpu.matmul %241, %76, %cst_99 {dimension_numbers = #tpu.dot_dimension_numbers<[1], [0], [0], [1], [0, 0, 1, 1], [], []>} : vector<8x32xbf16>, vector<32x64xbf16>, vector<8x64xf32> -> vector<8x64xf32>
    %243 = arith.addf %242, %79 : vector<8x64xf32>
    %244 = vector.extract_strided_slice %243 {offsets = [0, 0], sizes = [8, 48], strides = [1, 1]} : vector<8x64xf32> to vector<8x48xf32>
    %245 = arith.negf %244 : vector<8x48xf32>
    %246 = math.exp %245 : vector<8x48xf32>
    %cst_100 = arith.constant 1.000000e+00 : f32
    %247 = vector.broadcast %cst_100 : f32 to vector<8x48xf32>
    %248 = arith.addf %247, %246 : vector<8x48xf32>
    %249 = arith.divf %247, %248 : vector<8x48xf32>
    %250 = vector.extract_strided_slice %243 {offsets = [0, 48], sizes = [8, 16], strides = [1, 1]} : vector<8x64xf32> to vector<8x16xf32>
    %251 = math.tanh %250 : vector<8x16xf32>
    %252 = vector.extract_strided_slice %249 {offsets = [0, 0], sizes = [8, 16], strides = [1, 1]} : vector<8x48xf32> to vector<8x16xf32>
    %253 = vector.extract_strided_slice %249 {offsets = [0, 16], sizes = [8, 16], strides = [1, 1]} : vector<8x48xf32> to vector<8x16xf32>
    %254 = vector.extract_strided_slice %249 {offsets = [0, 32], sizes = [8, 16], strides = [1, 1]} : vector<8x48xf32> to vector<8x16xf32>
    %255 = arith.mulf %253, %213 : vector<8x16xf32>
    %256 = arith.mulf %252, %251 : vector<8x16xf32>
    %257 = arith.addf %255, %256 : vector<8x16xf32>
    %258 = math.tanh %257 : vector<8x16xf32>
    %259 = arith.mulf %254, %258 : vector<8x16xf32>
    %260 = vector.extract_strided_slice %259 {offsets = [0, 0], sizes = [1, 16], strides = [1, 1]} : vector<8x16xf32> to vector<1x16xf32>
    %c3_101 = arith.constant 3 : index
    %c0_102 = arith.constant 0 : index
    %261 = vector.load %arg16[%c3_101, %c0_102] : memref<16x16xf32, #tpu.memory_space<vmem>>, vector<1x16xf32>
    tpu.vector_store %arg16[%c3_101, %c0_102], %260 {strides = array<i32>} : memref<16x16xf32, #tpu.memory_space<vmem>>, vector<1x16xf32>,
    %262 = vector.extract_strided_slice %259 {offsets = [1, 0], sizes = [1, 16], strides = [1, 1]} : vector<8x16xf32> to vector<1x16xf32>
    %c11_103 = arith.constant 11 : index
    %c0_104 = arith.constant 0 : index
    %263 = vector.load %arg16[%c11_103, %c0_104] : memref<16x16xf32, #tpu.memory_space<vmem>>, vector<1x16xf32>
    tpu.vector_store %arg16[%c11_103, %c0_104], %262 {strides = array<i32>} : memref<16x16xf32, #tpu.memory_space<vmem>>, vector<1x16xf32>,
    %c32_105 = arith.constant 32 : index
    %c0_106 = arith.constant 0 : index
    %264 = vector.load %arg15[%c32_105, %c0_106] : memref<64x64xf32, #tpu.memory_space<vmem>>, vector<8x64xf32>
    %265 = arith.truncf %239 : vector<8x16xf32> to vector<8x16xbf16>
    %cst_107 = arith.constant dense<0.000000e+00> : vector<8x64xf32>
    %266 = tpu.matmul %265, %74, %cst_107 {dimension_numbers = #tpu.dot_dimension_numbers<[1], [0], [0], [1], [0, 0, 1, 1], [], []>} : vector<8x16xbf16>, vector<16x64xbf16>, vector<8x64xf32> -> vector<8x64xf32>
    %267 = arith.addf %264, %266 : vector<8x64xf32>
    %268 = vector.extract_strided_slice %267 {offsets = [0, 0], sizes = [8, 48], strides = [1, 1]} : vector<8x64xf32> to vector<8x48xf32>
    %269 = arith.negf %268 : vector<8x48xf32>
    %270 = math.exp %269 : vector<8x48xf32>
    %cst_108 = arith.constant 1.000000e+00 : f32
    %271 = vector.broadcast %cst_108 : f32 to vector<8x48xf32>
    %272 = arith.addf %271, %270 : vector<8x48xf32>
    %273 = arith.divf %271, %272 : vector<8x48xf32>
    %274 = vector.extract_strided_slice %267 {offsets = [0, 48], sizes = [8, 16], strides = [1, 1]} : vector<8x64xf32> to vector<8x16xf32>
    %275 = math.tanh %274 : vector<8x16xf32>
    %276 = vector.extract_strided_slice %273 {offsets = [0, 0], sizes = [8, 16], strides = [1, 1]} : vector<8x48xf32> to vector<8x16xf32>
    %277 = vector.extract_strided_slice %273 {offsets = [0, 16], sizes = [8, 16], strides = [1, 1]} : vector<8x48xf32> to vector<8x16xf32>
    %278 = vector.extract_strided_slice %273 {offsets = [0, 32], sizes = [8, 16], strides = [1, 1]} : vector<8x48xf32> to vector<8x16xf32>
    %279 = arith.mulf %277, %237 : vector<8x16xf32>
    %280 = arith.mulf %276, %275 : vector<8x16xf32>
    %281 = arith.addf %279, %280 : vector<8x16xf32>
    %282 = math.tanh %281 : vector<8x16xf32>
    %283 = arith.mulf %278, %282 : vector<8x16xf32>
    %284 = tpu.concatenate %283, %259 in 1 : vector<8x16xf32>, vector<8x16xf32> -> vector<8x32xf32>
    %285 = arith.truncf %284 : vector<8x32xf32> to vector<8x32xbf16>
    %cst_109 = arith.constant dense<0.000000e+00> : vector<8x64xf32>
    %286 = tpu.matmul %285, %76, %cst_109 {dimension_numbers = #tpu.dot_dimension_numbers<[1], [0], [0], [1], [0, 0, 1, 1], [], []>} : vector<8x32xbf16>, vector<32x64xbf16>, vector<8x64xf32> -> vector<8x64xf32>
    %287 = arith.addf %286, %79 : vector<8x64xf32>
    %288 = vector.extract_strided_slice %287 {offsets = [0, 0], sizes = [8, 48], strides = [1, 1]} : vector<8x64xf32> to vector<8x48xf32>
    %289 = arith.negf %288 : vector<8x48xf32>
    %290 = math.exp %289 : vector<8x48xf32>
    %cst_110 = arith.constant 1.000000e+00 : f32
    %291 = vector.broadcast %cst_110 : f32 to vector<8x48xf32>
    %292 = arith.addf %291, %290 : vector<8x48xf32>
    %293 = arith.divf %291, %292 : vector<8x48xf32>
    %294 = vector.extract_strided_slice %287 {offsets = [0, 48], sizes = [8, 16], strides = [1, 1]} : vector<8x64xf32> to vector<8x16xf32>
    %295 = math.tanh %294 : vector<8x16xf32>
    %296 = vector.extract_strided_slice %293 {offsets = [0, 0], sizes = [8, 16], strides = [1, 1]} : vector<8x48xf32> to vector<8x16xf32>
    %297 = vector.extract_strided_slice %293 {offsets = [0, 16], sizes = [8, 16], strides = [1, 1]} : vector<8x48xf32> to vector<8x16xf32>
    %298 = vector.extract_strided_slice %293 {offsets = [0, 32], sizes = [8, 16], strides = [1, 1]} : vector<8x48xf32> to vector<8x16xf32>
    %299 = arith.mulf %297, %257 : vector<8x16xf32>
    %300 = arith.mulf %296, %295 : vector<8x16xf32>
    %301 = arith.addf %299, %300 : vector<8x16xf32>
    %302 = math.tanh %301 : vector<8x16xf32>
    %303 = arith.mulf %298, %302 : vector<8x16xf32>
    %304 = vector.extract_strided_slice %303 {offsets = [0, 0], sizes = [1, 16], strides = [1, 1]} : vector<8x16xf32> to vector<1x16xf32>
    %c4_111 = arith.constant 4 : index
    %c0_112 = arith.constant 0 : index
    %305 = vector.load %arg16[%c4_111, %c0_112] : memref<16x16xf32, #tpu.memory_space<vmem>>, vector<1x16xf32>
    tpu.vector_store %arg16[%c4_111, %c0_112], %304 {strides = array<i32>} : memref<16x16xf32, #tpu.memory_space<vmem>>, vector<1x16xf32>,
    %306 = vector.extract_strided_slice %303 {offsets = [1, 0], sizes = [1, 16], strides = [1, 1]} : vector<8x16xf32> to vector<1x16xf32>
    %c12_113 = arith.constant 12 : index
    %c0_114 = arith.constant 0 : index
    %307 = vector.load %arg16[%c12_113, %c0_114] : memref<16x16xf32, #tpu.memory_space<vmem>>, vector<1x16xf32>
    tpu.vector_store %arg16[%c12_113, %c0_114], %306 {strides = array<i32>} : memref<16x16xf32, #tpu.memory_space<vmem>>, vector<1x16xf32>,
    %c40_115 = arith.constant 40 : index
    %c0_116 = arith.constant 0 : index
    %308 = vector.load %arg15[%c40_115, %c0_116] : memref<64x64xf32, #tpu.memory_space<vmem>>, vector<8x64xf32>
    %309 = arith.truncf %283 : vector<8x16xf32> to vector<8x16xbf16>
    %cst_117 = arith.constant dense<0.000000e+00> : vector<8x64xf32>
    %310 = tpu.matmul %309, %74, %cst_117 {dimension_numbers = #tpu.dot_dimension_numbers<[1], [0], [0], [1], [0, 0, 1, 1], [], []>} : vector<8x16xbf16>, vector<16x64xbf16>, vector<8x64xf32> -> vector<8x64xf32>
    %311 = arith.addf %308, %310 : vector<8x64xf32>
    %312 = vector.extract_strided_slice %311 {offsets = [0, 0], sizes = [8, 48], strides = [1, 1]} : vector<8x64xf32> to vector<8x48xf32>
    %313 = arith.negf %312 : vector<8x48xf32>
    %314 = math.exp %313 : vector<8x48xf32>
    %cst_118 = arith.constant 1.000000e+00 : f32
    %315 = vector.broadcast %cst_118 : f32 to vector<8x48xf32>
    %316 = arith.addf %315, %314 : vector<8x48xf32>
    %317 = arith.divf %315, %316 : vector<8x48xf32>
    %318 = vector.extract_strided_slice %311 {offsets = [0, 48], sizes = [8, 16], strides = [1, 1]} : vector<8x64xf32> to vector<8x16xf32>
    %319 = math.tanh %318 : vector<8x16xf32>
    %320 = vector.extract_strided_slice %317 {offsets = [0, 0], sizes = [8, 16], strides = [1, 1]} : vector<8x48xf32> to vector<8x16xf32>
    %321 = vector.extract_strided_slice %317 {offsets = [0, 16], sizes = [8, 16], strides = [1, 1]} : vector<8x48xf32> to vector<8x16xf32>
    %322 = vector.extract_strided_slice %317 {offsets = [0, 32], sizes = [8, 16], strides = [1, 1]} : vector<8x48xf32> to vector<8x16xf32>
    %323 = arith.mulf %321, %281 : vector<8x16xf32>
    %324 = arith.mulf %320, %319 : vector<8x16xf32>
    %325 = arith.addf %323, %324 : vector<8x16xf32>
    %326 = math.tanh %325 : vector<8x16xf32>
    %327 = arith.mulf %322, %326 : vector<8x16xf32>
    %328 = tpu.concatenate %327, %303 in 1 : vector<8x16xf32>, vector<8x16xf32> -> vector<8x32xf32>
    %329 = arith.truncf %328 : vector<8x32xf32> to vector<8x32xbf16>
    %cst_119 = arith.constant dense<0.000000e+00> : vector<8x64xf32>
    %330 = tpu.matmul %329, %76, %cst_119 {dimension_numbers = #tpu.dot_dimension_numbers<[1], [0], [0], [1], [0, 0, 1, 1], [], []>} : vector<8x32xbf16>, vector<32x64xbf16>, vector<8x64xf32> -> vector<8x64xf32>
    %331 = arith.addf %330, %79 : vector<8x64xf32>
    %332 = vector.extract_strided_slice %331 {offsets = [0, 0], sizes = [8, 48], strides = [1, 1]} : vector<8x64xf32> to vector<8x48xf32>
    %333 = arith.negf %332 : vector<8x48xf32>
    %334 = math.exp %333 : vector<8x48xf32>
    %cst_120 = arith.constant 1.000000e+00 : f32
    %335 = vector.broadcast %cst_120 : f32 to vector<8x48xf32>
    %336 = arith.addf %335, %334 : vector<8x48xf32>
    %337 = arith.divf %335, %336 : vector<8x48xf32>
    %338 = vector.extract_strided_slice %331 {offsets = [0, 48], sizes = [8, 16], strides = [1, 1]} : vector<8x64xf32> to vector<8x16xf32>
    %339 = math.tanh %338 : vector<8x16xf32>
    %340 = vector.extract_strided_slice %337 {offsets = [0, 0], sizes = [8, 16], strides = [1, 1]} : vector<8x48xf32> to vector<8x16xf32>
    %341 = vector.extract_strided_slice %337 {offsets = [0, 16], sizes = [8, 16], strides = [1, 1]} : vector<8x48xf32> to vector<8x16xf32>
    %342 = vector.extract_strided_slice %337 {offsets = [0, 32], sizes = [8, 16], strides = [1, 1]} : vector<8x48xf32> to vector<8x16xf32>
    %343 = arith.mulf %341, %301 : vector<8x16xf32>
    %344 = arith.mulf %340, %339 : vector<8x16xf32>
    %345 = arith.addf %343, %344 : vector<8x16xf32>
    %346 = math.tanh %345 : vector<8x16xf32>
    %347 = arith.mulf %342, %346 : vector<8x16xf32>
    %348 = vector.extract_strided_slice %347 {offsets = [0, 0], sizes = [1, 16], strides = [1, 1]} : vector<8x16xf32> to vector<1x16xf32>
    %c5_121 = arith.constant 5 : index
    %c0_122 = arith.constant 0 : index
    %349 = vector.load %arg16[%c5_121, %c0_122] : memref<16x16xf32, #tpu.memory_space<vmem>>, vector<1x16xf32>
    tpu.vector_store %arg16[%c5_121, %c0_122], %348 {strides = array<i32>} : memref<16x16xf32, #tpu.memory_space<vmem>>, vector<1x16xf32>,
    %350 = vector.extract_strided_slice %347 {offsets = [1, 0], sizes = [1, 16], strides = [1, 1]} : vector<8x16xf32> to vector<1x16xf32>
    %c13_123 = arith.constant 13 : index
    %c0_124 = arith.constant 0 : index
    %351 = vector.load %arg16[%c13_123, %c0_124] : memref<16x16xf32, #tpu.memory_space<vmem>>, vector<1x16xf32>
    tpu.vector_store %arg16[%c13_123, %c0_124], %350 {strides = array<i32>} : memref<16x16xf32, #tpu.memory_space<vmem>>, vector<1x16xf32>,
    %c48_125 = arith.constant 48 : index
    %c0_126 = arith.constant 0 : index
    %352 = vector.load %arg15[%c48_125, %c0_126] : memref<64x64xf32, #tpu.memory_space<vmem>>, vector<8x64xf32>
    %353 = arith.truncf %327 : vector<8x16xf32> to vector<8x16xbf16>
    %cst_127 = arith.constant dense<0.000000e+00> : vector<8x64xf32>
    %354 = tpu.matmul %353, %74, %cst_127 {dimension_numbers = #tpu.dot_dimension_numbers<[1], [0], [0], [1], [0, 0, 1, 1], [], []>} : vector<8x16xbf16>, vector<16x64xbf16>, vector<8x64xf32> -> vector<8x64xf32>
    %355 = arith.addf %352, %354 : vector<8x64xf32>
    %356 = vector.extract_strided_slice %355 {offsets = [0, 0], sizes = [8, 48], strides = [1, 1]} : vector<8x64xf32> to vector<8x48xf32>
    %357 = arith.negf %356 : vector<8x48xf32>
    %358 = math.exp %357 : vector<8x48xf32>
    %cst_128 = arith.constant 1.000000e+00 : f32
    %359 = vector.broadcast %cst_128 : f32 to vector<8x48xf32>
    %360 = arith.addf %359, %358 : vector<8x48xf32>
    %361 = arith.divf %359, %360 : vector<8x48xf32>
    %362 = vector.extract_strided_slice %355 {offsets = [0, 48], sizes = [8, 16], strides = [1, 1]} : vector<8x64xf32> to vector<8x16xf32>
    %363 = math.tanh %362 : vector<8x16xf32>
    %364 = vector.extract_strided_slice %361 {offsets = [0, 0], sizes = [8, 16], strides = [1, 1]} : vector<8x48xf32> to vector<8x16xf32>
    %365 = vector.extract_strided_slice %361 {offsets = [0, 16], sizes = [8, 16], strides = [1, 1]} : vector<8x48xf32> to vector<8x16xf32>
    %366 = vector.extract_strided_slice %361 {offsets = [0, 32], sizes = [8, 16], strides = [1, 1]} : vector<8x48xf32> to vector<8x16xf32>
    %367 = arith.mulf %365, %325 : vector<8x16xf32>
    %368 = arith.mulf %364, %363 : vector<8x16xf32>
    %369 = arith.addf %367, %368 : vector<8x16xf32>
    %370 = math.tanh %369 : vector<8x16xf32>
    %371 = arith.mulf %366, %370 : vector<8x16xf32>
    %372 = tpu.concatenate %371, %347 in 1 : vector<8x16xf32>, vector<8x16xf32> -> vector<8x32xf32>
    %373 = arith.truncf %372 : vector<8x32xf32> to vector<8x32xbf16>
    %cst_129 = arith.constant dense<0.000000e+00> : vector<8x64xf32>
    %374 = tpu.matmul %373, %76, %cst_129 {dimension_numbers = #tpu.dot_dimension_numbers<[1], [0], [0], [1], [0, 0, 1, 1], [], []>} : vector<8x32xbf16>, vector<32x64xbf16>, vector<8x64xf32> -> vector<8x64xf32>
    %375 = arith.addf %374, %79 : vector<8x64xf32>
    %376 = vector.extract_strided_slice %375 {offsets = [0, 0], sizes = [8, 48], strides = [1, 1]} : vector<8x64xf32> to vector<8x48xf32>
    %377 = arith.negf %376 : vector<8x48xf32>
    %378 = math.exp %377 : vector<8x48xf32>
    %cst_130 = arith.constant 1.000000e+00 : f32
    %379 = vector.broadcast %cst_130 : f32 to vector<8x48xf32>
    %380 = arith.addf %379, %378 : vector<8x48xf32>
    %381 = arith.divf %379, %380 : vector<8x48xf32>
    %382 = vector.extract_strided_slice %375 {offsets = [0, 48], sizes = [8, 16], strides = [1, 1]} : vector<8x64xf32> to vector<8x16xf32>
    %383 = math.tanh %382 : vector<8x16xf32>
    %384 = vector.extract_strided_slice %381 {offsets = [0, 0], sizes = [8, 16], strides = [1, 1]} : vector<8x48xf32> to vector<8x16xf32>
    %385 = vector.extract_strided_slice %381 {offsets = [0, 16], sizes = [8, 16], strides = [1, 1]} : vector<8x48xf32> to vector<8x16xf32>
    %386 = vector.extract_strided_slice %381 {offsets = [0, 32], sizes = [8, 16], strides = [1, 1]} : vector<8x48xf32> to vector<8x16xf32>
    %387 = arith.mulf %385, %345 : vector<8x16xf32>
    %388 = arith.mulf %384, %383 : vector<8x16xf32>
    %389 = arith.addf %387, %388 : vector<8x16xf32>
    %390 = math.tanh %389 : vector<8x16xf32>
    %391 = arith.mulf %386, %390 : vector<8x16xf32>
    %392 = vector.extract_strided_slice %391 {offsets = [0, 0], sizes = [1, 16], strides = [1, 1]} : vector<8x16xf32> to vector<1x16xf32>
    %c6_131 = arith.constant 6 : index
    %c0_132 = arith.constant 0 : index
    %393 = vector.load %arg16[%c6_131, %c0_132] : memref<16x16xf32, #tpu.memory_space<vmem>>, vector<1x16xf32>
    tpu.vector_store %arg16[%c6_131, %c0_132], %392 {strides = array<i32>} : memref<16x16xf32, #tpu.memory_space<vmem>>, vector<1x16xf32>,
    %394 = vector.extract_strided_slice %391 {offsets = [1, 0], sizes = [1, 16], strides = [1, 1]} : vector<8x16xf32> to vector<1x16xf32>
    %c14_133 = arith.constant 14 : index
    %c0_134 = arith.constant 0 : index
    %395 = vector.load %arg16[%c14_133, %c0_134] : memref<16x16xf32, #tpu.memory_space<vmem>>, vector<1x16xf32>
    tpu.vector_store %arg16[%c14_133, %c0_134], %394 {strides = array<i32>} : memref<16x16xf32, #tpu.memory_space<vmem>>, vector<1x16xf32>,
    %c56_135 = arith.constant 56 : index
    %c0_136 = arith.constant 0 : index
    %396 = vector.load %arg15[%c56_135, %c0_136] : memref<64x64xf32, #tpu.memory_space<vmem>>, vector<8x64xf32>
    %397 = arith.truncf %371 : vector<8x16xf32> to vector<8x16xbf16>
    %cst_137 = arith.constant dense<0.000000e+00> : vector<8x64xf32>
    %398 = tpu.matmul %397, %74, %cst_137 {dimension_numbers = #tpu.dot_dimension_numbers<[1], [0], [0], [1], [0, 0, 1, 1], [], []>} : vector<8x16xbf16>, vector<16x64xbf16>, vector<8x64xf32> -> vector<8x64xf32>
    %399 = arith.addf %396, %398 : vector<8x64xf32>
    %400 = vector.extract_strided_slice %399 {offsets = [0, 0], sizes = [8, 48], strides = [1, 1]} : vector<8x64xf32> to vector<8x48xf32>
    %401 = arith.negf %400 : vector<8x48xf32>
    %402 = math.exp %401 : vector<8x48xf32>
    %cst_138 = arith.constant 1.000000e+00 : f32
    %403 = vector.broadcast %cst_138 : f32 to vector<8x48xf32>
    %404 = arith.addf %403, %402 : vector<8x48xf32>
    %405 = arith.divf %403, %404 : vector<8x48xf32>
    %406 = vector.extract_strided_slice %399 {offsets = [0, 48], sizes = [8, 16], strides = [1, 1]} : vector<8x64xf32> to vector<8x16xf32>
    %407 = math.tanh %406 : vector<8x16xf32>
    %408 = vector.extract_strided_slice %405 {offsets = [0, 0], sizes = [8, 16], strides = [1, 1]} : vector<8x48xf32> to vector<8x16xf32>
    %409 = vector.extract_strided_slice %405 {offsets = [0, 16], sizes = [8, 16], strides = [1, 1]} : vector<8x48xf32> to vector<8x16xf32>
    %410 = vector.extract_strided_slice %405 {offsets = [0, 32], sizes = [8, 16], strides = [1, 1]} : vector<8x48xf32> to vector<8x16xf32>
    %411 = arith.mulf %409, %369 : vector<8x16xf32>
    %412 = arith.mulf %408, %407 : vector<8x16xf32>
    %413 = arith.addf %411, %412 : vector<8x16xf32>
    %414 = math.tanh %413 : vector<8x16xf32>
    %415 = arith.mulf %410, %414 : vector<8x16xf32>
    %416 = tpu.concatenate %415, %391 in 1 : vector<8x16xf32>, vector<8x16xf32> -> vector<8x32xf32>
    %417 = arith.truncf %416 : vector<8x32xf32> to vector<8x32xbf16>
    %cst_139 = arith.constant dense<0.000000e+00> : vector<8x64xf32>
    %418 = tpu.matmul %417, %76, %cst_139 {dimension_numbers = #tpu.dot_dimension_numbers<[1], [0], [0], [1], [0, 0, 1, 1], [], []>} : vector<8x32xbf16>, vector<32x64xbf16>, vector<8x64xf32> -> vector<8x64xf32>
    %419 = arith.addf %418, %79 : vector<8x64xf32>
    %420 = vector.extract_strided_slice %419 {offsets = [0, 0], sizes = [8, 48], strides = [1, 1]} : vector<8x64xf32> to vector<8x48xf32>
    %421 = arith.negf %420 : vector<8x48xf32>
    %422 = math.exp %421 : vector<8x48xf32>
    %cst_140 = arith.constant 1.000000e+00 : f32
    %423 = vector.broadcast %cst_140 : f32 to vector<8x48xf32>
    %424 = arith.addf %423, %422 : vector<8x48xf32>
    %425 = arith.divf %423, %424 : vector<8x48xf32>
    %426 = vector.extract_strided_slice %419 {offsets = [0, 48], sizes = [8, 16], strides = [1, 1]} : vector<8x64xf32> to vector<8x16xf32>
    %427 = math.tanh %426 : vector<8x16xf32>
    %428 = vector.extract_strided_slice %425 {offsets = [0, 0], sizes = [8, 16], strides = [1, 1]} : vector<8x48xf32> to vector<8x16xf32>
    %429 = vector.extract_strided_slice %425 {offsets = [0, 16], sizes = [8, 16], strides = [1, 1]} : vector<8x48xf32> to vector<8x16xf32>
    %430 = vector.extract_strided_slice %425 {offsets = [0, 32], sizes = [8, 16], strides = [1, 1]} : vector<8x48xf32> to vector<8x16xf32>
    %431 = arith.mulf %429, %389 : vector<8x16xf32>
    %432 = arith.mulf %428, %427 : vector<8x16xf32>
    %433 = arith.addf %431, %432 : vector<8x16xf32>
    %434 = math.tanh %433 : vector<8x16xf32>
    %435 = arith.mulf %430, %434 : vector<8x16xf32>
    %436 = vector.extract_strided_slice %435 {offsets = [0, 0], sizes = [1, 16], strides = [1, 1]} : vector<8x16xf32> to vector<1x16xf32>
    %c7_141 = arith.constant 7 : index
    %c0_142 = arith.constant 0 : index
    %437 = vector.load %arg16[%c7_141, %c0_142] : memref<16x16xf32, #tpu.memory_space<vmem>>, vector<1x16xf32>
    tpu.vector_store %arg16[%c7_141, %c0_142], %436 {strides = array<i32>} : memref<16x16xf32, #tpu.memory_space<vmem>>, vector<1x16xf32>,
    %438 = vector.extract_strided_slice %435 {offsets = [1, 0], sizes = [1, 16], strides = [1, 1]} : vector<8x16xf32> to vector<1x16xf32>
    %c15_143 = arith.constant 15 : index
    %c0_144 = arith.constant 0 : index
    %439 = vector.load %arg16[%c15_143, %c0_144] : memref<16x16xf32, #tpu.memory_space<vmem>>, vector<1x16xf32>
    tpu.vector_store %arg16[%c15_143, %c0_144], %438 {strides = array<i32>} : memref<16x16xf32, #tpu.memory_space<vmem>>, vector<1x16xf32>,
    %440 = vector.extract_strided_slice %415 {offsets = [0, 0], sizes = [2, 16], strides = [1, 1]} : vector<8x16xf32> to vector<2x16xf32>
    %c0_145 = arith.constant 0 : index
    %c0_146 = arith.constant 0 : index
    %c0_147 = arith.constant 0 : index
    %441 = vector.load %arg12[%c0_145, %c0_146, %c0_147] : memref<2x2x16xf32, #tpu.memory_space<vmem>>, vector<1x2x16xf32>
    %442 = vector.shape_cast %441 : vector<1x2x16xf32> to vector<2x16xf32>
    %443 = vector.shape_cast %440 : vector<2x16xf32> to vector<1x2x16xf32>
    tpu.vector_store %arg12[%c0_145, %c0_146, %c0_147], %443 {strides = array<i32>} : memref<2x2x16xf32, #tpu.memory_space<vmem>>, vector<1x2x16xf32>,
    %444 = vector.extract_strided_slice %435 {offsets = [0, 0], sizes = [2, 16], strides = [1, 1]} : vector<8x16xf32> to vector<2x16xf32>
    %c1_148 = arith.constant 1 : index
    %c0_149 = arith.constant 0 : index
    %c0_150 = arith.constant 0 : index
    %445 = vector.load %arg12[%c1_148, %c0_149, %c0_150] : memref<2x2x16xf32, #tpu.memory_space<vmem>>, vector<1x2x16xf32>
    %446 = vector.shape_cast %445 : vector<1x2x16xf32> to vector<2x16xf32>
    %447 = vector.shape_cast %444 : vector<2x16xf32> to vector<1x2x16xf32>
    tpu.vector_store %arg12[%c1_148, %c0_149, %c0_150], %447 {strides = array<i32>} : memref<2x2x16xf32, #tpu.memory_space<vmem>>, vector<1x2x16xf32>,
    %448 = vector.extract_strided_slice %413 {offsets = [0, 0], sizes = [2, 16], strides = [1, 1]} : vector<8x16xf32> to vector<2x16xf32>
    %c0_151 = arith.constant 0 : index
    %c0_152 = arith.constant 0 : index
    %c0_153 = arith.constant 0 : index
    %449 = vector.load %arg13[%c0_151, %c0_152, %c0_153] : memref<2x2x16xf32, #tpu.memory_space<vmem>>, vector<1x2x16xf32>
    %450 = vector.shape_cast %449 : vector<1x2x16xf32> to vector<2x16xf32>
    %451 = vector.shape_cast %448 : vector<2x16xf32> to vector<1x2x16xf32>
    tpu.vector_store %arg13[%c0_151, %c0_152, %c0_153], %451 {strides = array<i32>} : memref<2x2x16xf32, #tpu.memory_space<vmem>>, vector<1x2x16xf32>,
    %452 = vector.extract_strided_slice %433 {offsets = [0, 0], sizes = [2, 16], strides = [1, 1]} : vector<8x16xf32> to vector<2x16xf32>
    %c1_154 = arith.constant 1 : index
    %c0_155 = arith.constant 0 : index
    %c0_156 = arith.constant 0 : index
    %453 = vector.load %arg13[%c1_154, %c0_155, %c0_156] : memref<2x2x16xf32, #tpu.memory_space<vmem>>, vector<1x2x16xf32>
    %454 = vector.shape_cast %453 : vector<1x2x16xf32> to vector<2x16xf32>
    %455 = vector.shape_cast %452 : vector<2x16xf32> to vector<1x2x16xf32>
    tpu.vector_store %arg13[%c1_154, %c0_155, %c0_156], %455 {strides = array<i32>} : memref<2x2x16xf32, #tpu.memory_space<vmem>>, vector<1x2x16xf32>,
    %c0_157 = arith.constant 0 : index
    %c0_158 = arith.constant 0 : index
    %456 = vector.load %arg16[%c0_157, %c0_158] : memref<16x16xf32, #tpu.memory_space<vmem>>, vector<16x16xf32>
    %c0_159 = arith.constant 0 : index
    %c0_160 = arith.constant 0 : index
    %457 = vector.load %arg9[%c0_159, %c0_160] : memref<16x15xf32, #tpu.memory_space<vmem>>, vector<16x15xf32>
    %cst_161 = arith.constant dense<0.000000e+00> : vector<16x15xf32>
    %458 = tpu.matmul %456, %457, %cst_161 {dimension_numbers = #tpu.dot_dimension_numbers<[1], [0], [0], [1], [0, 0, 1, 1], [], []>} : vector<16x16xf32>, vector<16x15xf32>, vector<16x15xf32> -> vector<16x15xf32>
    %c0_162 = arith.constant 0 : index
    %c0_163 = arith.constant 0 : index
    %459 = vector.load %arg10[%c0_162, %c0_163] : memref<1x15xf32, #tpu.memory_space<vmem>>, vector<1x15xf32>
    %460 = vector.broadcast %459 : vector<1x15xf32> to vector<16x15xf32>
    %461 = arith.addf %458, %460 : vector<16x15xf32>
    %cst_164 = arith.constant dense<0xFF800000> : vector<16xf32>
    %462 = vector.multi_reduction <maximumf>, %461, %cst_164 [1] : vector<16x15xf32> to vector<16xf32>
    %463 = vector.shape_cast %462 : vector<16xf32> to vector<16x1xf32>
    %464 = vector.broadcast %463 : vector<16x1xf32> to vector<16x15xf32>
    %465 = arith.subf %461, %464 : vector<16x15xf32>
    %466 = math.exp %465 : vector<16x15xf32>
    %cst_165 = arith.constant dense<0.000000e+00> : vector<16xf32>
    %467 = vector.multi_reduction <add>, %466, %cst_165 [1] : vector<16x15xf32> to vector<16xf32>
    %468 = vector.shape_cast %467 : vector<16xf32> to vector<16x1xf32>
    %469 = vector.broadcast %468 : vector<16x1xf32> to vector<16x15xf32>
    %470 = arith.divf %466, %469 : vector<16x15xf32>
    %c0_166 = arith.constant 0 : index
    %c0_167 = arith.constant 0 : index
    %471 = vector.load %arg11[%c0_166, %c0_167] : memref<16x15xf32, #tpu.memory_space<vmem>>, vector<16x15xf32>
    tpu.vector_store %arg11[%c0_166, %c0_167], %470 {strides = array<i32>} : memref<16x15xf32, #tpu.memory_space<vmem>>, vector<16x15xf32>,
    return
  }
}

</mosaic_0001>

<llo_original>
// kernel: lstm_forward.1
$region0: #{lstm_forward.1}
  #allocation0 [shape = 'u32[]', space=smem, size = 0x4, offset = 0x4, fixed_abs, tag = 'smem constant byte address 0x4 - core index']
  #allocation1 [shape = 'u32[144,128]{1,0:T(1,128)}', space=vmem, size = 0x12000, scoped, tag = 'internal scratch']
  #allocation2 [shape = 'f32[15,64]{1,0:T(8,128)}', space=vmem, size = 0x2000, scoped, tag = 'scratch operand']
  #allocation3 [shape = 'f32[64,64]{1,0:T(8,128)}', space=vmem, size = 0x8000, scoped, tag = 'scratch operand']
  #allocation4 [shape = 'f32[16,16]{1,0:T(8,128)}', space=vmem, size = 0x2000, scoped, tag = 'scratch operand']
  %s0 = inlined_call_operand.vmem [shape: s32[16], index: 0, kind: input, shape index: {}]
  %s1 = inlined_call_operand.vmem [shape: f32[2,8,16], index: 1, kind: input, shape index: {}]
  %s2 = inlined_call_operand.vmem [shape: f32[2,8,16], index: 2, kind: input, shape index: {}]
  %s3 = inlined_call_operand.hbm [shape: f32[15,32], index: 3, kind: input, shape index: {}]
  %s4 = inlined_call_operand.vmem [shape: f32[32,64], index: 4, kind: input, shape index: {}]
  %s5 = inlined_call_operand.hbm [shape: f32[1,64], index: 5, kind: input, shape index: {}]
  %s6 = inlined_call_operand.hbm [shape: f32[16,64], index: 6, kind: input, shape index: {}]
  %s7 = inlined_call_operand.vmem [shape: f32[32,64], index: 7, kind: input, shape index: {}]
  %s8 = inlined_call_operand.hbm [shape: f32[1,64], index: 8, kind: input, shape index: {}]
  %s9 = inlined_call_operand.hbm [shape: f32[16,15], index: 9, kind: input, shape index: {}]
  %s10 = inlined_call_operand.vmem [shape: f32[1,15], index: 10, kind: input, shape index: {}]
  %s11 = inlined_call_operand.hbm [shape: f32[16,15], index: 11, kind: output, shape index: {0}]
  %s12 = inlined_call_operand.hbm [shape: f32[2,2,16], index: 12, kind: output, shape index: {1}]
  %s13 = inlined_call_operand.hbm [shape: f32[2,2,16], index: 13, kind: output, shape index: {2}]
  %14 = xla_tuple %s11, %s12, %s13
  %s15 = sld [smem:[#allocation0]]
  $region94: #{lstm_forward.1} parent=0
    _
  %s17 = ssub.s32 1, %s15
  %s18 = scalar_select 0, %s17, %s15
  $region1: #{lstm_forward.1} parent=0
    #allocation5 [shape = 'u8[512]{0}', space=smem, size = 0x200, scoped, tag = 'input window, operand 0, single buffered']
    #allocation6 [shape = 's32[1]{0}', space=sflag, size = 0x4, scoped, tag = 'scoped memory for lstm_forward.1']
    #allocation7 [shape = 's32[1]{0}', space=sflag, size = 0x4, scoped, tag = 'scoped memory for lstm_forward.1']
    #allocation8 [shape = 's32[1]{0}', space=sflag, size = 0x4, scoped, tag = 'scoped memory for lstm_forward.1']
    #allocation9 [shape = 'u8[8192]{0}', space=vmem, size = 0x2000, scoped, tag = 'input window, operand 3, single buffered']
    #allocation10 [shape = 'u8[512]{0}', space=vmem, size = 0x400, scoped, tag = 'input window, operand 5, single buffered']
    #allocation11 [shape = 's32[1]{0}', space=sflag, size = 0x4, scoped, tag = 'scoped memory for lstm_forward.1']
    #allocation12 [shape = 'u8[8192]{0}', space=vmem, size = 0x2000, scoped, tag = 'input window, operand 6, single buffered']
    #allocation13 [shape = 'u8[512]{0}', space=vmem, size = 0x400, scoped, tag = 'input window, operand 8, single buffered']
    #allocation14 [shape = 's32[1]{0}', space=sflag, size = 0x4, scoped, tag = 'scoped memory for lstm_forward.1']
    #allocation15 [shape = 'u8[8192]{0}', space=vmem, size = 0x2000, scoped, tag = 'input window, operand 9, single buffered']
    #allocation16 [shape = 'u8[8192]{0}', space=vmem, size = 0x2000, scoped, tag = 'output window, operand 0, single buffered']
    #allocation17 [shape = 'u8[2048]{0}', space=vmem, size = 0x800, scoped, tag = 'output window, operand 1, single buffered']
    #allocation18 [shape = 's32[1]{0}', space=sflag, size = 0x4, scoped, tag = 'scoped memory for lstm_forward.1']
    #allocation19 [shape = 'u8[2048]{0}', space=vmem, size = 0x800, scoped, tag = 'output window, operand 2, single buffered']
    %19 = vsyncpa [#allocation8], 0
    %20 = vsyncpa [#allocation6], 0
    %21 = vsyncpa [#allocation11], 0
    %22 = vsyncpa [#allocation14], 0
    %23 = vsyncpa [#allocation7], 0
    %24 = vsyncpa [#allocation18], 0
    // Predicated region
    $region2: #{lstm_forward.1} parent=1 // pred_check
      _
    $region3: #{lstm_forward.1} parent=1 // pred_check_branch
      %26 = sbr.rel (0) target = $region5
    $region4: #{lstm_forward.1} parent=1 // pred_region
      %s28 = ssub.s32 16, 16
      %29 = vsyncadd [#allocation8], %s28
      %s31 = sshll.u32 %s0, 4
      %s32 = int_to_ptr.vmem [resolvable:$true] %s31
      %34 = dma.vmem_to_smem %s32, 16, [#allocation5], [#allocation8]
    $region5: #{lstm_forward.1} parent=1 // pred_fallthru
      _
    // Predicated region
    $region6: #{lstm_forward.1} parent=1 // pred_check
      _
    $region7: #{lstm_forward.1} parent=1 // pred_check_branch
      %36 = sbr.rel (0) target = $region9
    $region8: #{lstm_forward.1} parent=1 // pred_region
      _
    $region9: #{lstm_forward.1} parent=1 // pred_fallthru
      _
    // Predicated region
    $region10: #{lstm_forward.1} parent=1 // pred_check
      _
    $region11: #{lstm_forward.1} parent=1 // pred_check_branch
      %38 = sbr.rel (0) target = $region13
    $region12: #{lstm_forward.1} parent=1 // pred_region
      _
    $region13: #{lstm_forward.1} parent=1 // pred_fallthru
      _
    // Predicated region
    $region14: #{lstm_forward.1} parent=1 // pred_check
      _
    $region15: #{lstm_forward.1} parent=1 // pred_check_branch
      %40 = sbr.rel (0) target = $region17
    $region16: #{lstm_forward.1} parent=1 // pred_region
      %s42 = ssub.s32 256, 256
      %43 = vsyncadd [#allocation6], %s42
      %s44 = sshll.u32 [#allocation9], 4
      %s45 = int_to_ptr.vmem [resolvable:$true] %s44
      %50 = dma.hbm_to_vmem [thread:$0]  %s3, 256, %s45, [#allocation6], 128, 128, 8
    $region17: #{lstm_forward.1} parent=1 // pred_fallthru
      _
    // Predicated region
    $region18: #{lstm_forward.1} parent=1 // pred_check
      _
    $region19: #{lstm_forward.1} parent=1 // pred_check_branch
      %52 = sbr.rel (0) target = $region21
    $region20: #{lstm_forward.1} parent=1 // pred_region
      _
    $region21: #{lstm_forward.1} parent=1 // pred_fallthru
      _
    // Predicated region
    $region22: #{lstm_forward.1} parent=1 // pred_check
      _
    $region23: #{lstm_forward.1} parent=1 // pred_check_branch
      %54 = sbr.rel (0) target = $region25
    $region24: #{lstm_forward.1} parent=1 // pred_region
      %s56 = ssub.s32 16, 16
      %57 = vsyncadd [#allocation11], %s56
      %s59 = sshll.u32 [#allocation10], 4
      %s60 = int_to_ptr.vmem [resolvable:$true] %s59
      %62 = dma.hbm_to_vmem [thread:$0]  %s5, 16, %s60, [#allocation11]
    $region25: #{lstm_forward.1} parent=1 // pred_fallthru
      _
    // Predicated region
    $region26: #{lstm_forward.1} parent=1 // pred_check
      _
    $region27: #{lstm_forward.1} parent=1 // pred_check_branch
      %64 = sbr.rel (0) target = $region29
    $region28: #{lstm_forward.1} parent=1 // pred_region
      %s66 = ssub.s32 256, 256
      %67 = vsyncadd [#allocation11], %s66
      %s68 = sshll.u32 [#allocation12], 4
      %s69 = int_to_ptr.vmem [resolvable:$true] %s68
      %74 = dma.hbm_to_vmem [thread:$0]  %s6, 256, %s69, [#allocation11], 128, 128, 8
    $region29: #{lstm_forward.1} parent=1 // pred_fallthru
      _
    // Predicated region
    $region30: #{lstm_forward.1} parent=1 // pred_check
      _
    $region31: #{lstm_forward.1} parent=1 // pred_check_branch
      %76 = sbr.rel (0) target = $region33
    $region32: #{lstm_forward.1} parent=1 // pred_region
      _
    $region33: #{lstm_forward.1} parent=1 // pred_fallthru
      _
    // Predicated region
    $region34: #{lstm_forward.1} parent=1 // pred_check
      _
    $region35: #{lstm_forward.1} parent=1 // pred_check_branch
      %78 = sbr.rel (0) target = $region37
    $region36: #{lstm_forward.1} parent=1 // pred_region
      %s80 = ssub.s32 16, 16
      %81 = vsyncadd [#allocation14], %s80
      %s83 = sshll.u32 [#allocation13], 4
      %s84 = int_to_ptr.vmem [resolvable:$true] %s83
      %86 = dma.hbm_to_vmem [thread:$0]  %s8, 16, %s84, [#allocation14]
    $region37: #{lstm_forward.1} parent=1 // pred_fallthru
      _
    // Predicated region
    $region38: #{lstm_forward.1} parent=1 // pred_check
      _
    $region39: #{lstm_forward.1} parent=1 // pred_check_branch
      %88 = sbr.rel (0) target = $region41
    $region40: #{lstm_forward.1} parent=1 // pred_region
      %s90 = ssub.s32 256, 256
      %91 = vsyncadd [#allocation14], %s90
      %s92 = sshll.u32 [#allocation15], 4
      %s93 = int_to_ptr.vmem [resolvable:$true] %s92
      %98 = dma.hbm_to_vmem [thread:$0]  %s9, 256, %s93, [#allocation14], 128, 128, 8
    $region41: #{lstm_forward.1} parent=1 // pred_fallthru
      _
    // Predicated region
    $region42: #{lstm_forward.1} parent=1 // pred_check
      _
    $region43: #{lstm_forward.1} parent=1 // pred_check_branch
      %100 = sbr.rel (0) target = $region45
    $region44: #{lstm_forward.1} parent=1 // pred_region
      _
    $region45: #{lstm_forward.1} parent=1 // pred_fallthru
      _
    // Predicated region
    $region46: #{lstm_forward.1} parent=1 // pred_check
      _
    $region47: #{lstm_forward.1} parent=1 // pred_check_branch
      %102 = sbr.rel (0) target = $region49
    $region48: #{lstm_forward.1} parent=1 // pred_region
      %103 = dma.done [#allocation8], 16
    $region49: #{lstm_forward.1} parent=1 // pred_fallthru
      _
    // Predicated region
    $region50: #{lstm_forward.1} parent=1 // pred_check
      _
    $region51: #{lstm_forward.1} parent=1 // pred_check_branch
      %105 = sbr.rel (0) target = $region53
    $region52: #{lstm_forward.1} parent=1 // pred_region
      %106 = dma.done [#allocation6], 256
    $region53: #{lstm_forward.1} parent=1 // pred_fallthru
      _
    // Predicated region
    $region54: #{lstm_forward.1} parent=1 // pred_check
      _
    $region55: #{lstm_forward.1} parent=1 // pred_check_branch
      %108 = sbr.rel (0) target = $region57
    $region56: #{lstm_forward.1} parent=1 // pred_region
      %109 = dma.done [#allocation11], 16
    $region57: #{lstm_forward.1} parent=1 // pred_fallthru
      _
    // Predicated region
    $region58: #{lstm_forward.1} parent=1 // pred_check
      _
    $region59: #{lstm_forward.1} parent=1 // pred_check_branch
      %111 = sbr.rel (0) target = $region61
    $region60: #{lstm_forward.1} parent=1 // pred_region
      %112 = dma.done [#allocation11], 256
    $region61: #{lstm_forward.1} parent=1 // pred_fallthru
      _
    // Predicated region
    $region62: #{lstm_forward.1} parent=1 // pred_check
      _
    $region63: #{lstm_forward.1} parent=1 // pred_check_branch
      %114 = sbr.rel (0) target = $region65
    $region64: #{lstm_forward.1} parent=1 // pred_region
      %115 = dma.done [#allocation14], 16
    $region65: #{lstm_forward.1} parent=1 // pred_fallthru
      _
    // Predicated region
    $region66: #{lstm_forward.1} parent=1 // pred_check
      _
    $region67: #{lstm_forward.1} parent=1 // pred_check_branch
      %117 = sbr.rel (0) target = $region69
    $region68: #{lstm_forward.1} parent=1 // pred_region
      %118 = dma.done [#allocation14], 256
    $region69: #{lstm_forward.1} parent=1 // pred_fallthru
      _
    %119 = sfence
    %v121 = vld [vmem:[#allocation9] sm:$0xff]
    %v122 = vld [vmem:[#allocation9 + $0x8] sm:$0x7f]
    %v123 = vld [vmem:[%s4] sm:$0xff]
    %v124 = vld [vmem:[%s4 + $0x8] sm:$0xff]
    %v125 = vld [vmem:[%s4 + $0x10] sm:$0xff]
    %v126 = vld [vmem:[%s4 + $0x18] sm:$0xff]
    %v127 = vld [vmem:[#allocation10] sm:$0x1]
    %v129 = vlaneseq
    %v130 = vshrl.u32 %v129, 7
    %v131 = vsub.s32 0, %v130
    %v132 = vrot.slane %v127, %v131
    %vm134 = vcmask 261120
    %v136 = vsel %vm134, %v121, 0
    %v139 = vsel %vm134, %v122, 0
    %141 = vmatprep.subr.mxu0 0.0
    %142 = vmatpush1.msra.mxu0 %v123
    %143 = vmatprep.subr.mxu0 0.0
    %144 = vmatpush1.msra.mxu0 %v124
    %145 = vmatprep.subr.mxu0 0.0
    %146 = vmatpush1.msra.mxu0 %v125
    %147 = vmatprep.subr.mxu0 0.0
    %148 = vmatpush1.msra.mxu0 %v126
    %149 = vmatprep.subr.mxu0 0.0
    %150 = vmatpush1.msra.mxu0 0.0
    %151 = vmatprep.subr.mxu0 0.0
    %152 = vmatpush1.msra.mxu0 0.0
    %153 = vmatprep.subr.mxu0 0.0
    %154 = vmatpush1.msra.mxu0 0.0
    %155 = vmatprep.subr.mxu0 0.0
    %156 = vmatpush1.msra.mxu0 0.0
    %157 = vmatprep.subr.mxu0 0.0
    %158 = vmatpush1.msra.mxu0 0.0
    %159 = vmatprep.subr.mxu0 0.0
    %160 = vmatpush1.msra.mxu0 0.0
    %161 = vmatprep.subr.mxu0 0.0
    %162 = vmatpush1.msra.mxu0 0.0
    %163 = vmatprep.subr.mxu0 0.0
    %164 = vmatpush1.msra.mxu0 0.0
    %165 = vmatprep.subr.mxu0 0.0
    %166 = vmatpush1.msra.mxu0 0.0
    %167 = vmatprep.subr.mxu0 0.0
    %168 = vmatpush1.msra.mxu0 0.0
    %169 = vmatprep.subr.mxu0 0.0
    %170 = vmatpush1.msra.mxu0 0.0
    %171 = vmatprep.subr.mxu0 0.0
    %172 = vmatpush1.msra.mxu0 0.0
    %173 = vmatprep.subr.mxu0 0.0
    %174 = vmatpush1.msra.mxu0 0.0
    %175 = vmatprep.subr.mxu0 0.0
    %176 = vmatpush1.msra.mxu0 0.0
    %177 = vmatprep.subr.mxu0 0.0
    %178 = vmatpush1.msra.mxu0 0.0
    %179 = vmatprep.subr.mxu0 0.0
    %180 = vmatpush1.msra.mxu0 0.0
    %181 = vmatprep.subr.mxu0 0.0
    %182 = vmatpush1.msra.mxu0 0.0
    %183 = vmatprep.subr.mxu0 0.0
    %184 = vmatpush1.msra.mxu0 0.0
    %185 = vmatprep.subr.mxu0 0.0
    %186 = vmatpush1.msra.mxu0 0.0
    %187 = vmatprep.subr.mxu0 0.0
    %188 = vmatpush1.msra.mxu0 0.0
    %189 = vmatprep.subr.mxu0 0.0
    %190 = vmatpush1.msra.mxu0 0.0
    %191 = vmatprep.subr.mxu0 0.0
    %192 = vmatpush1.msra.mxu0 0.0
    %193 = vmatprep.subr.mxu0 0.0
    %194 = vmatpush1.msra.mxu0 0.0
    %195 = vmatprep.subr.mxu0 0.0
    %196 = vmatpush1.msra.mxu0 0.0
    %197 = vmatprep.subr.mxu0 0.0
    %198 = vmatpush1.msra.mxu0 0.0
    %199 = vmatprep.subr.mxu0 0.0
    %200 = vmatpush1.msra.mxu0 0.0
    %201 = vmatprep.subr.mxu0 0.0
    %202 = vmatpush1.msra.mxu0 0.0
    %203 = vmatprep.subr.mxu0 0.0
    %204 = vmatpush1.msra.mxu0 0.0
    %205 = vmatprep.mubr.f32.mxu0 0.0
    %206 = vmatmul.mubr.f32.gmra.mrb[0].mxu0 %v136
    %v207 = vpop.f32.mrb[0].mxu0
    %v208 = vadd.f32 %v132, %v207
    %v209 = vpop.f32.mrb[0].mxu0
    %210 = vmatprep.mubr.f32.mxu0 0.0
    %211 = vmatmul.mubr.f32.gmra.mrb[0].mxu0 %v139
    %v212 = vpop.f32.mrb[0].mxu0
    %v213 = vadd.f32 %v132, %v212
    %v214 = vpop.f32.mrb[0].mxu0
    %215 = vdwg.mxu0
    %vm216 = vcmask 523264
    %217 = vst.msk [vmem:[#allocation2] sm:$0xff] %vm216, %v208
    %vm218 = vcmask 522240
    %219 = vst.msk [vmem:[#allocation2 + $0x8] sm:$0x7f] %vm218, %v213
    %220 = vst.msk [vmem:[#allocation3] sm:$0xff] %vm216, 0.0
    %221 = vst.msk [vmem:[#allocation3 + $0x8] sm:$0xff] %vm216, 0.0
    %222 = vst.msk [vmem:[#allocation3 + $0x10] sm:$0xff] %vm216, 0.0
    %223 = vst.msk [vmem:[#allocation3 + $0x18] sm:$0xff] %vm216, 0.0
    %224 = vst.msk [vmem:[#allocation3 + $0x20] sm:$0xff] %vm216, 0.0
    %225 = vst.msk [vmem:[#allocation3 + $0x28] sm:$0xff] %vm216, 0.0
    %226 = vst.msk [vmem:[#allocation3 + $0x30] sm:$0xff] %vm216, 0.0
    %227 = vst.msk [vmem:[#allocation3 + $0x38] sm:$0xff] %vm216, 0.0
    %s228 = sld [smem:[#allocation5]]
    %s229 = scalar_lea.vmem [#allocation2], %s228
    %v230 = vld [vmem:[%s229] sm:$0x1]
    %vm231 = vcmask 516096
    %232 = vst.msk [vmem:[#allocation3] sm:$0x1] %vm231, %v230
    %s233 = sld [smem:[#allocation5 + $0x8]]
    %s234 = scalar_lea.vmem [#allocation2], %s233
    %v235 = vld [vmem:[%s234] sm:$0x1]
    %236 = vst.msk [vmem:[#allocation3 + $0x1] sm:$0x1] %vm231, %v235
    %s237 = sld [smem:[#allocation5 + $0x1]]
    %s238 = scalar_lea.vmem [#allocation2], %s237
    %v239 = vld [vmem:[%s238] sm:$0x1]
    %240 = vst.msk [vmem:[#allocation3 + $0x8] sm:$0x1] %vm231, %v239
    %s241 = sld [smem:[#allocation5 + $0x9]]
    %s242 = scalar_lea.vmem [#allocation2], %s241
    %v243 = vld [vmem:[%s242] sm:$0x1]
    %244 = vst.msk [vmem:[#allocation3 + $0x9] sm:$0x1] %vm231, %v243
    %s245 = sld [smem:[#allocation5 + $0x2]]
    %s246 = scalar_lea.vmem [#allocation2], %s245
    %v247 = vld [vmem:[%s246] sm:$0x1]
    %248 = vst.msk [vmem:[#allocation3 + $0x10] sm:$0x1] %vm231, %v247
    %s249 = sld [smem:[#allocation5 + $0xa]]
    %s250 = scalar_lea.vmem [#allocation2], %s249
    %v251 = vld [vmem:[%s250] sm:$0x1]
    %252 = vst.msk [vmem:[#allocation3 + $0x11] sm:$0x1] %vm231, %v251
    %s253 = sld [smem:[#allocation5 + $0x3]]
    %s254 = scalar_lea.vmem [#allocation2], %s253
    %v255 = vld [vmem:[%s254] sm:$0x1]
    %256 = vst.msk [vmem:[#allocation3 + $0x18] sm:$0x1] %vm231, %v255
    %s257 = sld [smem:[#allocation5 + $0xb]]
    %s258 = scalar_lea.vmem [#allocation2], %s257
    %v259 = vld [vmem:[%s258] sm:$0x1]
    %260 = vst.msk [vmem:[#allocation3 + $0x19] sm:$0x1] %vm231, %v259
    %s261 = sld [smem:[#allocation5 + $0x4]]
    %s262 = scalar_lea.vmem [#allocation2], %s261
    %v263 = vld [vmem:[%s262] sm:$0x1]
    %264 = vst.msk [vmem:[#allocation3 + $0x20] sm:$0x1] %vm231, %v263
    %s265 = sld [smem:[#allocation5 + $0xc]]
    %s266 = scalar_lea.vmem [#allocation2], %s265
    %v267 = vld [vmem:[%s266] sm:$0x1]
    %268 = vst.msk [vmem:[#allocation3 + $0x21] sm:$0x1] %vm231, %v267
    %s269 = sld [smem:[#allocation5 + $0x5]]
    %s270 = scalar_lea.vmem [#allocation2], %s269
    %v271 = vld [vmem:[%s270] sm:$0x1]
    %272 = vst.msk [vmem:[#allocation3 + $0x28] sm:$0x1] %vm231, %v271
    %s273 = sld [smem:[#allocation5 + $0xd]]
    %s274 = scalar_lea.vmem [#allocation2], %s273
    %v275 = vld [vmem:[%s274] sm:$0x1]
    %276 = vst.msk [vmem:[#allocation3 + $0x29] sm:$0x1] %vm231, %v275
    %s277 = sld [smem:[#allocation5 + $0x6]]
    %s278 = scalar_lea.vmem [#allocation2], %s277
    %v279 = vld [vmem:[%s278] sm:$0x1]
    %280 = vst.msk [vmem:[#allocation3 + $0x30] sm:$0x1] %vm231, %v279
    %s281 = sld [smem:[#allocation5 + $0xe]]
    %s282 = scalar_lea.vmem [#allocation2], %s281
    %v283 = vld [vmem:[%s282] sm:$0x1]
    %284 = vst.msk [vmem:[#allocation3 + $0x31] sm:$0x1] %vm231, %v283
    %s285 = sld [smem:[#allocation5 + $0x7]]
    %s286 = scalar_lea.vmem [#allocation2], %s285
    %v287 = vld [vmem:[%s286] sm:$0x1]
    %288 = vst.msk [vmem:[#allocation3 + $0x38] sm:$0x1] %vm231, %v287
    %s289 = sld [smem:[#allocation5 + $0xf]]
    %s290 = scalar_lea.vmem [#allocation2], %s289
    %v291 = vld [vmem:[%s290] sm:$0x1]
    %292 = vst.msk [vmem:[#allocation3 + $0x39] sm:$0x1] %vm231, %v291
    %v293 = vld [vmem:[#allocation12] sm:$0xff]
    %v294 = vld [vmem:[#allocation12 + $0x8] sm:$0xff]
    %v295 = vpack.c.bf16 %v294, %v293
    %v296 = vld [vmem:[%s7] sm:$0xff]
    %v297 = vld [vmem:[%s7 + $0x8] sm:$0xff]
    %v298 = vld [vmem:[%s7 + $0x10] sm:$0xff]
    %v299 = vld [vmem:[%s7 + $0x18] sm:$0xff]
    %v300 = vpack.c.bf16 %v297, %v296
    %v301 = vpack.c.bf16 %v299, %v298
    %v302 = vld [vmem:[#allocation13] sm:$0x1]
    %v304 = vlaneseq
    %v305 = vshrl.u32 %v304, 7
    %v306 = vsub.s32 0, %v305
    %v307 = vrot.slane %v302, %v306
    %v309 = vld [vmem:[%s1] sm:$0xff]
    %v310 = vld [vmem:[%s2] sm:$0xff]
    %s311 = scalar_lea.vmem %s1, 8
    %v312 = vld [vmem:[%s311] sm:$0xff]
    %s313 = scalar_lea.vmem %s2, 8
    %v314 = vld [vmem:[%s313] sm:$0xff]
    %v315 = vld [vmem:[#allocation3] sm:$0xff]
    %v316 = vpack.c.bf16 %v309, %v309
    %vm317 = vcmask 130048
    %v319 = vsel %vm317, %v316, 0
    %321 = vmatprep.subr.bf16.mxu0 0
    %322 = vmatpush1.bf16.msra.mxu0 %v295
    %323 = vmatprep.subr.bf16.mxu0 0
    %324 = vmatpush1.bf16.msra.mxu0 0
    %325 = vmatprep.subr.bf16.mxu0 0
    %326 = vmatpush1.bf16.msra.mxu0 0
    %327 = vmatprep.subr.bf16.mxu0 0
    %328 = vmatpush1.bf16.msra.mxu0 0
    %329 = vmatprep.subr.bf16.mxu0 0
    %330 = vmatpush1.bf16.msra.mxu0 0
    %331 = vmatprep.subr.bf16.mxu0 0
    %332 = vmatpush1.bf16.msra.mxu0 0
    %333 = vmatprep.subr.bf16.mxu0 0
    %334 = vmatpush1.bf16.msra.mxu0 0
    %335 = vmatprep.subr.bf16.mxu0 0
    %336 = vmatpush1.bf16.msra.mxu0 0
    %337 = vmatprep.subr.bf16.mxu0 0
    %338 = vmatpush1.bf16.msra.mxu0 0
    %339 = vmatprep.subr.bf16.mxu0 0
    %340 = vmatpush1.bf16.msra.mxu0 0
    %341 = vmatprep.subr.bf16.mxu0 0
    %342 = vmatpush1.bf16.msra.mxu0 0
    %343 = vmatprep.subr.bf16.mxu0 0
    %344 = vmatpush1.bf16.msra.mxu0 0
    %345 = vmatprep.subr.bf16.mxu0 0
    %346 = vmatpush1.bf16.msra.mxu0 0
    %347 = vmatprep.subr.bf16.mxu0 0
    %348 = vmatpush1.bf16.msra.mxu0 0
    %349 = vmatprep.subr.bf16.mxu0 0
    %350 = vmatpush1.bf16.msra.mxu0 0
    %351 = vmatprep.subr.bf16.mxu0 0
    %352 = vmatpush1.bf16.msra.mxu0 0
    %353 = vmatprep.mubr.bf16.mxu0 0
    %354 = vmatmul.mubr.bf16.gmra.mrb[0].mxu0 %v319
    %v355 = vpop.f32.mrb[0].mxu0
    %v356 = vadd.f32 0.0, %v355
    %v357 = vpop.f32.mrb[0].mxu0
    %v358 = vpop.f32.mrb[0].mxu0
    %v359 = vpop.f32.mrb[0].mxu0
    %360 = vdwg.mxu0
    %v361 = vadd.f32 %v315, %v356
    %v362 = vxor.u32 %v361, 2147483648
    %v363 = vmul.f32 %v362, 1.442695
    %v364 = vpow.pop %v363
    %v365 = vadd.f32 %v364, 1.0
    %v366 = vrcp.pop %v365
    %v367 = vmul.f32 1.0, %v366
    %v368 = vtanh.pop %v361
    %370 = vrot.lane.b32.xlu0 %v310, 16
    %v371 = vpop.permute.xlu0 %370
    %v373 = vmul.f32 %v367, %v371
    %375 = vrot.lane.b32.xlu0 %v368, 80
    %v376 = vpop.permute.xlu0 %375
    %v378 = vmul.f32 %v367, %v376
    %380 = vrot.lane.b32.xlu0 %v378, 16
    %v381 = vpop.permute.xlu0 %380
    %v383 = vadd.f32 %v373, %v381
    %v384 = vtanh.pop %v383
    %386 = vrot.lane.b32.xlu0 %v384, 16
    %v387 = vpop.permute.xlu0 %386
    %v389 = vmul.f32 %v367, %v387
    %391 = vrot.lane.b32.xlu0 %v389, 96
    %v392 = vpop.permute.xlu0 %391
    %395 = vrot.lane.b32.xlu0 %v312, 16
    %v396 = vpop.permute.xlu0 %395
    %v398 = vsel %vm317, %v392, %v396
    %v399 = vpack.c.bf16 %v398, %v398
    %v401 = vsel %vm134, %v399, 0
    %403 = vmatprep.subr.bf16.mxu0 0
    %404 = vmatpush1.bf16.msra.mxu0 %v300
    %405 = vmatprep.subr.bf16.mxu0 0
    %406 = vmatpush1.bf16.msra.mxu0 %v301
    %407 = vmatprep.subr.bf16.mxu0 0
    %408 = vmatpush1.bf16.msra.mxu0 0
    %409 = vmatprep.subr.bf16.mxu0 0
    %410 = vmatpush1.bf16.msra.mxu0 0
    %411 = vmatprep.subr.bf16.mxu0 0
    %412 = vmatpush1.bf16.msra.mxu0 0
    %413 = vmatprep.subr.bf16.mxu0 0
    %414 = vmatpush1.bf16.msra.mxu0 0
    %415 = vmatprep.subr.bf16.mxu0 0
    %416 = vmatpush1.bf16.msra.mxu0 0
    %417 = vmatprep.subr.bf16.mxu0 0
    %418 = vmatpush1.bf16.msra.mxu0 0
    %419 = vmatprep.subr.bf16.mxu0 0
    %420 = vmatpush1.bf16.msra.mxu0 0
    %421 = vmatprep.subr.bf16.mxu0 0
    %422 = vmatpush1.bf16.msra.mxu0 0
    %423 = vmatprep.subr.bf16.mxu0 0
    %424 = vmatpush1.bf16.msra.mxu0 0
    %425 = vmatprep.subr.bf16.mxu0 0
    %426 = vmatpush1.bf16.msra.mxu0 0
    %427 = vmatprep.subr.bf16.mxu0 0
    %428 = vmatpush1.bf16.msra.mxu0 0
    %429 = vmatprep.subr.bf16.mxu0 0
    %430 = vmatpush1.bf16.msra.mxu0 0
    %431 = vmatprep.subr.bf16.mxu0 0
    %432 = vmatpush1.bf16.msra.mxu0 0
    %433 = vmatprep.subr.bf16.mxu0 0
    %434 = vmatpush1.bf16.msra.mxu0 0
    %435 = vmatprep.mubr.bf16.mxu0 0
    %436 = vmatmul.mubr.bf16.gmra.mrb[0].mxu0 %v401
    %v437 = vpop.f32.mrb[0].mxu0
    %v438 = vadd.f32 %v307, %v437
    %v439 = vpop.f32.mrb[0].mxu0
    %v440 = vpop.f32.mrb[0].mxu0
    %v441 = vpop.f32.mrb[0].mxu0
    %442 = vdwg.mxu0
    %v443 = vxor.u32 %v438, 2147483648
    %v444 = vmul.f32 %v443, 1.442695
    %v445 = vpow.pop %v444
    %v446 = vadd.f32 %v445, 1.0
    %v447 = vrcp.pop %v446
    %v448 = vmul.f32 1.0, %v447
    %v449 = vtanh.pop %v438
    %451 = vrot.lane.b32.xlu0 %v314, 16
    %v452 = vpop.permute.xlu0 %451
    %v454 = vmul.f32 %v448, %v452
    %456 = vrot.lane.b32.xlu0 %v449, 80
    %v457 = vpop.permute.xlu0 %456
    %v459 = vmul.f32 %v448, %v457
    %461 = vrot.lane.b32.xlu0 %v459, 16
    %v462 = vpop.permute.xlu0 %461
    %v464 = vadd.f32 %v454, %v462
    %v465 = vtanh.pop %v464
    %467 = vrot.lane.b32.xlu0 %v465, 16
    %v468 = vpop.permute.xlu0 %467
    %v470 = vmul.f32 %v448, %v468
    %472 = vrot.lane.b32.xlu0 %v470, 96
    %v473 = vpop.permute.xlu0 %472
    %vm475 = vcmask 122880
    %476 = vst.msk [vmem:[#allocation4] sm:$0x1] %vm475, %v473
    %vm477 = vcmask 123905
    %478 = vst.msk [vmem:[#allocation4 + $0x7] sm:$0x2] %vm477, %v473
    %v479 = vld [vmem:[#allocation3 + $0x8] sm:$0xff]
    %v480 = vpack.c.bf16 %v389, %v389
    %482 = vrot.lane.b32.xlu0 %v480, 96
    %v483 = vpop.permute.xlu0 %482
    %v485 = vsel %vm317, %v483, 0
    %487 = vmatprep.subr.bf16.mxu0 0
    %488 = vmatpush1.bf16.msra.mxu0 %v295
    %489 = vmatprep.subr.bf16.mxu0 0
    %490 = vmatpush1.bf16.msra.mxu0 0
    %491 = vmatprep.subr.bf16.mxu0 0
    %492 = vmatpush1.bf16.msra.mxu0 0
    %493 = vmatprep.subr.bf16.mxu0 0
    %494 = vmatpush1.bf16.msra.mxu0 0
    %495 = vmatprep.subr.bf16.mxu0 0
    %496 = vmatpush1.bf16.msra.mxu0 0
    %497 = vmatprep.subr.bf16.mxu0 0
    %498 = vmatpush1.bf16.msra.mxu0 0
    %499 = vmatprep.subr.bf16.mxu0 0
    %500 = vmatpush1.bf16.msra.mxu0 0
    %501 = vmatprep.subr.bf16.mxu0 0
    %502 = vmatpush1.bf16.msra.mxu0 0
    %503 = vmatprep.subr.bf16.mxu0 0
    %504 = vmatpush1.bf16.msra.mxu0 0
    %505 = vmatprep.subr.bf16.mxu0 0
    %506 = vmatpush1.bf16.msra.mxu0 0
    %507 = vmatprep.subr.bf16.mxu0 0
    %508 = vmatpush1.bf16.msra.mxu0 0
    %509 = vmatprep.subr.bf16.mxu0 0
    %510 = vmatpush1.bf16.msra.mxu0 0
    %511 = vmatprep.subr.bf16.mxu0 0
    %512 = vmatpush1.bf16.msra.mxu0 0
    %513 = vmatprep.subr.bf16.mxu0 0
    %514 = vmatpush1.bf16.msra.mxu0 0
    %515 = vmatprep.subr.bf16.mxu0 0
    %516 = vmatpush1.bf16.msra.mxu0 0
    %517 = vmatprep.subr.bf16.mxu0 0
    %518 = vmatpush1.bf16.msra.mxu0 0
    %519 = vmatprep.mubr.bf16.mxu0 0
    %520 = vmatmul.mubr.bf16.gmra.mrb[0].mxu0 %v485
    %v521 = vpop.f32.mrb[0].mxu0
    %v522 = vadd.f32 0.0, %v521
    %v523 = vpop.f32.mrb[0].mxu0
    %v524 = vpop.f32.mrb[0].mxu0
    %v525 = vpop.f32.mrb[0].mxu0
    %526 = vdwg.mxu0
    %v527 = vadd.f32 %v479, %v522
    %v528 = vxor.u32 %v527, 2147483648
    %v529 = vmul.f32 %v528, 1.442695
    %v530 = vpow.pop %v529
    %v531 = vadd.f32 %v530, 1.0
    %v532 = vrcp.pop %v531
    %v533 = vmul.f32 1.0, %v532
    %v534 = vtanh.pop %v527
    %v535 = vmul.f32 %v533, %v383
    %537 = vrot.lane.b32.xlu0 %v534, 80
    %v538 = vpop.permute.xlu0 %537
    %v540 = vmul.f32 %v533, %v538
    %542 = vrot.lane.b32.xlu0 %v540, 16
    %v543 = vpop.permute.xlu0 %542
    %v545 = vadd.f32 %v535, %v543
    %v546 = vtanh.pop %v545
    %548 = vrot.lane.b32.xlu0 %v546, 16
    %v549 = vpop.permute.xlu0 %548
    %v551 = vmul.f32 %v533, %v549
    %553 = vrot.lane.b32.xlu0 %v551, 96
    %v554 = vpop.permute.xlu0 %553
    %556 = vrot.lane.b32.xlu0 %v470, 112
    %v557 = vpop.permute.xlu0 %556
    %v559 = vsel %vm317, %v554, %v557
    %v560 = vpack.c.bf16 %v559, %v559
    %v562 = vsel %vm134, %v560, 0
    %564 = vmatprep.subr.bf16.mxu0 0
    %565 = vmatpush1.bf16.msra.mxu0 %v300
    %566 = vmatprep.subr.bf16.mxu0 0
    %567 = vmatpush1.bf16.msra.mxu0 %v301
    %568 = vmatprep.subr.bf16.mxu0 0
    %569 = vmatpush1.bf16.msra.mxu0 0
    %570 = vmatprep.subr.bf16.mxu0 0
    %571 = vmatpush1.bf16.msra.mxu0 0
    %572 = vmatprep.subr.bf16.mxu0 0
    %573 = vmatpush1.bf16.msra.mxu0 0
    %574 = vmatprep.subr.bf16.mxu0 0
    %575 = vmatpush1.bf16.msra.mxu0 0
    %576 = vmatprep.subr.bf16.mxu0 0
    %577 = vmatpush1.bf16.msra.mxu0 0
    %578 = vmatprep.subr.bf16.mxu0 0
    %579 = vmatpush1.bf16.msra.mxu0 0
    %580 = vmatprep.subr.bf16.mxu0 0
    %581 = vmatpush1.bf16.msra.mxu0 0
    %582 = vmatprep.subr.bf16.mxu0 0
    %583 = vmatpush1.bf16.msra.mxu0 0
    %584 = vmatprep.subr.bf16.mxu0 0
    %585 = vmatpush1.bf16.msra.mxu0 0
    %586 = vmatprep.subr.bf16.mxu0 0
    %587 = vmatpush1.bf16.msra.mxu0 0
    %588 = vmatprep.subr.bf16.mxu0 0
    %589 = vmatpush1.bf16.msra.mxu0 0
    %590 = vmatprep.subr.bf16.mxu0 0
    %591 = vmatpush1.bf16.msra.mxu0 0
    %592 = vmatprep.subr.bf16.mxu0 0
    %593 = vmatpush1.bf16.msra.mxu0 0
    %594 = vmatprep.subr.bf16.mxu0 0
    %595 = vmatpush1.bf16.msra.mxu0 0
    %596 = vmatprep.mubr.bf16.mxu0 0
    %597 = vmatmul.mubr.bf16.gmra.mrb[0].mxu0 %v562
    %v598 = vpop.f32.mrb[0].mxu0
    %v599 = vadd.f32 %v307, %v598
    %v600 = vpop.f32.mrb[0].mxu0
    %v601 = vpop.f32.mrb[0].mxu0
    %v602 = vpop.f32.mrb[0].mxu0
    %603 = vdwg.mxu0
    %v604 = vxor.u32 %v599, 2147483648
    %v605 = vmul.f32 %v604, 1.442695
    %v606 = vpow.pop %v605
    %v607 = vadd.f32 %v606, 1.0
    %v608 = vrcp.pop %v607
    %v609 = vmul.f32 1.0, %v608
    %v610 = vtanh.pop %v599
    %v611 = vmul.f32 %v609, %v464
    %613 = vrot.lane.b32.xlu0 %v610, 80
    %v614 = vpop.permute.xlu0 %613
    %v616 = vmul.f32 %v609, %v614
    %618 = vrot.lane.b32.xlu0 %v616, 16
    %v619 = vpop.permute.xlu0 %618
    %v621 = vadd.f32 %v611, %v619
    %v622 = vtanh.pop %v621
    %624 = vrot.lane.b32.xlu0 %v622, 16
    %v625 = vpop.permute.xlu0 %624
    %v627 = vmul.f32 %v609, %v625
    %629 = vrot.lane.b32.xlu0 %v627, 96
    %v630 = vpop.permute.xlu0 %629
    %632 = vst.msk [vmem:[#allocation4 + $0x1] sm:$0x1] %vm475, %v630
    %633 = vst.msk [vmem:[#allocation4 + $0x8] sm:$0x2] %vm477, %v630
    %v634 = vld [vmem:[#allocation3 + $0x10] sm:$0xff]
    %v635 = vpack.c.bf16 %v551, %v551
    %637 = vrot.lane.b32.xlu0 %v635, 96
    %v638 = vpop.permute.xlu0 %637
    %v640 = vsel %vm317, %v638, 0
    %642 = vmatprep.subr.bf16.mxu0 0
    %643 = vmatpush1.bf16.msra.mxu0 %v295
    %644 = vmatprep.subr.bf16.mxu0 0
    %645 = vmatpush1.bf16.msra.mxu0 0
    %646 = vmatprep.subr.bf16.mxu0 0
    %647 = vmatpush1.bf16.msra.mxu0 0
    %648 = vmatprep.subr.bf16.mxu0 0
    %649 = vmatpush1.bf16.msra.mxu0 0
    %650 = vmatprep.subr.bf16.mxu0 0
    %651 = vmatpush1.bf16.msra.mxu0 0
    %652 = vmatprep.subr.bf16.mxu0 0
    %653 = vmatpush1.bf16.msra.mxu0 0
    %654 = vmatprep.subr.bf16.mxu0 0
    %655 = vmatpush1.bf16.msra.mxu0 0
    %656 = vmatprep.subr.bf16.mxu0 0
    %657 = vmatpush1.bf16.msra.mxu0 0
    %658 = vmatprep.subr.bf16.mxu0 0
    %659 = vmatpush1.bf16.msra.mxu0 0
    %660 = vmatprep.subr.bf16.mxu0 0
    %661 = vmatpush1.bf16.msra.mxu0 0
    %662 = vmatprep.subr.bf16.mxu0 0
    %663 = vmatpush1.bf16.msra.mxu0 0
    %664 = vmatprep.subr.bf16.mxu0 0
    %665 = vmatpush1.bf16.msra.mxu0 0
    %666 = vmatprep.subr.bf16.mxu0 0
    %667 = vmatpush1.bf16.msra.mxu0 0
    %668 = vmatprep.subr.bf16.mxu0 0
    %669 = vmatpush1.bf16.msra.mxu0 0
    %670 = vmatprep.subr.bf16.mxu0 0
    %671 = vmatpush1.bf16.msra.mxu0 0
    %672 = vmatprep.subr.bf16.mxu0 0
    %673 = vmatpush1.bf16.msra.mxu0 0
    %674 = vmatprep.mubr.bf16.mxu0 0
    %675 = vmatmul.mubr.bf16.gmra.mrb[0].mxu0 %v640
    %v676 = vpop.f32.mrb[0].mxu0
    %v677 = vadd.f32 0.0, %v676
    %v678 = vpop.f32.mrb[0].mxu0
    %v679 = vpop.f32.mrb[0].mxu0
    %v680 = vpop.f32.mrb[0].mxu0
    %681 = vdwg.mxu0
    %v682 = vadd.f32 %v634, %v677
    %v683 = vxor.u32 %v682, 2147483648
    %v684 = vmul.f32 %v683, 1.442695
    %v685 = vpow.pop %v684
    %v686 = vadd.f32 %v685, 1.0
    %v687 = vrcp.pop %v686
    %v688 = vmul.f32 1.0, %v687
    %v689 = vtanh.pop %v682
    %v690 = vmul.f32 %v688, %v545
    %692 = vrot.lane.b32.xlu0 %v689, 80
    %v693 = vpop.permute.xlu0 %692
    %v695 = vmul.f32 %v688, %v693
    %697 = vrot.lane.b32.xlu0 %v695, 16
    %v698 = vpop.permute.xlu0 %697
    %v700 = vadd.f32 %v690, %v698
    %v701 = vtanh.pop %v700
    %703 = vrot.lane.b32.xlu0 %v701, 16
    %v704 = vpop.permute.xlu0 %703
    %v706 = vmul.f32 %v688, %v704
    %708 = vrot.lane.b32.xlu0 %v706, 96
    %v709 = vpop.permute.xlu0 %708
    %711 = vrot.lane.b32.xlu0 %v627, 112
    %v712 = vpop.permute.xlu0 %711
    %v714 = vsel %vm317, %v709, %v712
    %v715 = vpack.c.bf16 %v714, %v714
    %v717 = vsel %vm134, %v715, 0
    %719 = vmatprep.subr.bf16.mxu0 0
    %720 = vmatpush1.bf16.msra.mxu0 %v300
    %721 = vmatprep.subr.bf16.mxu0 0
    %722 = vmatpush1.bf16.msra.mxu0 %v301
    %723 = vmatprep.subr.bf16.mxu0 0
    %724 = vmatpush1.bf16.msra.mxu0 0
    %725 = vmatprep.subr.bf16.mxu0 0
    %726 = vmatpush1.bf16.msra.mxu0 0
    %727 = vmatprep.subr.bf16.mxu0 0
    %728 = vmatpush1.bf16.msra.mxu0 0
    %729 = vmatprep.subr.bf16.mxu0 0
    %730 = vmatpush1.bf16.msra.mxu0 0
    %731 = vmatprep.subr.bf16.mxu0 0
    %732 = vmatpush1.bf16.msra.mxu0 0
    %733 = vmatprep.subr.bf16.mxu0 0
    %734 = vmatpush1.bf16.msra.mxu0 0
    %735 = vmatprep.subr.bf16.mxu0 0
    %736 = vmatpush1.bf16.msra.mxu0 0
    %737 = vmatprep.subr.bf16.mxu0 0
    %738 = vmatpush1.bf16.msra.mxu0 0
    %739 = vmatprep.subr.bf16.mxu0 0
    %740 = vmatpush1.bf16.msra.mxu0 0
    %741 = vmatprep.subr.bf16.mxu0 0
    %742 = vmatpush1.bf16.msra.mxu0 0
    %743 = vmatprep.subr.bf16.mxu0 0
    %744 = vmatpush1.bf16.msra.mxu0 0
    %745 = vmatprep.subr.bf16.mxu0 0
    %746 = vmatpush1.bf16.msra.mxu0 0
    %747 = vmatprep.subr.bf16.mxu0 0
    %748 = vmatpush1.bf16.msra.mxu0 0
    %749 = vmatprep.subr.bf16.mxu0 0
    %750 = vmatpush1.bf16.msra.mxu0 0
    %751 = vmatprep.mubr.bf16.mxu0 0
    %752 = vmatmul.mubr.bf16.gmra.mrb[0].mxu0 %v717
    %v753 = vpop.f32.mrb[0].mxu0
    %v754 = vadd.f32 %v307, %v753
    %v755 = vpop.f32.mrb[0].mxu0
    %v756 = vpop.f32.mrb[0].mxu0
    %v757 = vpop.f32.mrb[0].mxu0
    %758 = vdwg.mxu0
    %v759 = vxor.u32 %v754, 2147483648
    %v760 = vmul.f32 %v759, 1.442695
    %v761 = vpow.pop %v760
    %v762 = vadd.f32 %v761, 1.0
    %v763 = vrcp.pop %v762
    %v764 = vmul.f32 1.0, %v763
    %v765 = vtanh.pop %v754
    %v766 = vmul.f32 %v764, %v621
    %768 = vrot.lane.b32.xlu0 %v765, 80
    %v769 = vpop.permute.xlu0 %768
    %v771 = vmul.f32 %v764, %v769
    %773 = vrot.lane.b32.xlu0 %v771, 16
    %v774 = vpop.permute.xlu0 %773
    %v776 = vadd.f32 %v766, %v774
    %v777 = vtanh.pop %v776
    %779 = vrot.lane.b32.xlu0 %v777, 16
    %v780 = vpop.permute.xlu0 %779
    %v782 = vmul.f32 %v764, %v780
    %784 = vrot.lane.b32.xlu0 %v782, 96
    %v785 = vpop.permute.xlu0 %784
    %787 = vst.msk [vmem:[#allocation4 + $0x2] sm:$0x1] %vm475, %v785
    %788 = vst.msk [vmem:[#allocation4 + $0x9] sm:$0x2] %vm477, %v785
    %v789 = vld [vmem:[#allocation3 + $0x18] sm:$0xff]
    %v790 = vpack.c.bf16 %v706, %v706
    %792 = vrot.lane.b32.xlu0 %v790, 96
    %v793 = vpop.permute.xlu0 %792
    %v795 = vsel %vm317, %v793, 0
    %797 = vmatprep.subr.bf16.mxu0 0
    %798 = vmatpush1.bf16.msra.mxu0 %v295
    %799 = vmatprep.subr.bf16.mxu0 0
    %800 = vmatpush1.bf16.msra.mxu0 0
    %801 = vmatprep.subr.bf16.mxu0 0
    %802 = vmatpush1.bf16.msra.mxu0 0
    %803 = vmatprep.subr.bf16.mxu0 0
    %804 = vmatpush1.bf16.msra.mxu0 0
    %805 = vmatprep.subr.bf16.mxu0 0
    %806 = vmatpush1.bf16.msra.mxu0 0
    %807 = vmatprep.subr.bf16.mxu0 0
    %808 = vmatpush1.bf16.msra.mxu0 0
    %809 = vmatprep.subr.bf16.mxu0 0
    %810 = vmatpush1.bf16.msra.mxu0 0
    %811 = vmatprep.subr.bf16.mxu0 0
    %812 = vmatpush1.bf16.msra.mxu0 0
    %813 = vmatprep.subr.bf16.mxu0 0
    %814 = vmatpush1.bf16.msra.mxu0 0
    %815 = vmatprep.subr.bf16.mxu0 0
    %816 = vmatpush1.bf16.msra.mxu0 0
    %817 = vmatprep.subr.bf16.mxu0 0
    %818 = vmatpush1.bf16.msra.mxu0 0
    %819 = vmatprep.subr.bf16.mxu0 0
    %820 = vmatpush1.bf16.msra.mxu0 0
    %821 = vmatprep.subr.bf16.mxu0 0
    %822 = vmatpush1.bf16.msra.mxu0 0
    %823 = vmatprep.subr.bf16.mxu0 0
    %824 = vmatpush1.bf16.msra.mxu0 0
    %825 = vmatprep.subr.bf16.mxu0 0
    %826 = vmatpush1.bf16.msra.mxu0 0
    %827 = vmatprep.subr.bf16.mxu0 0
    %828 = vmatpush1.bf16.msra.mxu0 0
    %829 = vmatprep.mubr.bf16.mxu0 0
    %830 = vmatmul.mubr.bf16.gmra.mrb[0].mxu0 %v795
    %v831 = vpop.f32.mrb[0].mxu0
    %v832 = vadd.f32 0.0, %v831
    %v833 = vpop.f32.mrb[0].mxu0
    %v834 = vpop.f32.mrb[0].mxu0
    %v835 = vpop.f32.mrb[0].mxu0
    %836 = vdwg.mxu0
    %v837 = vadd.f32 %v789, %v832
    %v838 = vxor.u32 %v837, 2147483648
    %v839 = vmul.f32 %v838, 1.442695
    %v840 = vpow.pop %v839
    %v841 = vadd.f32 %v840, 1.0
    %v842 = vrcp.pop %v841
    %v843 = vmul.f32 1.0, %v842
    %v844 = vtanh.pop %v837
    %v845 = vmul.f32 %v843, %v700
    %847 = vrot.lane.b32.xlu0 %v844, 80
    %v848 = vpop.permute.xlu0 %847
    %v850 = vmul.f32 %v843, %v848
    %852 = vrot.lane.b32.xlu0 %v850, 16
    %v853 = vpop.permute.xlu0 %852
    %v855 = vadd.f32 %v845, %v853
    %v856 = vtanh.pop %v855
    %858 = vrot.lane.b32.xlu0 %v856, 16
    %v859 = vpop.permute.xlu0 %858
    %v861 = vmul.f32 %v843, %v859
    %863 = vrot.lane.b32.xlu0 %v861, 96
    %v864 = vpop.permute.xlu0 %863
    %866 = vrot.lane.b32.xlu0 %v782, 112
    %v867 = vpop.permute.xlu0 %866
    %v869 = vsel %vm317, %v864, %v867
    %v870 = vpack.c.bf16 %v869, %v869
    %v872 = vsel %vm134, %v870, 0
    %874 = vmatprep.subr.bf16.mxu0 0
    %875 = vmatpush1.bf16.msra.mxu0 %v300
    %876 = vmatprep.subr.bf16.mxu0 0
    %877 = vmatpush1.bf16.msra.mxu0 %v301
    %878 = vmatprep.subr.bf16.mxu0 0
    %879 = vmatpush1.bf16.msra.mxu0 0
    %880 = vmatprep.subr.bf16.mxu0 0
    %881 = vmatpush1.bf16.msra.mxu0 0
    %882 = vmatprep.subr.bf16.mxu0 0
    %883 = vmatpush1.bf16.msra.mxu0 0
    %884 = vmatprep.subr.bf16.mxu0 0
    %885 = vmatpush1.bf16.msra.mxu0 0
    %886 = vmatprep.subr.bf16.mxu0 0
    %887 = vmatpush1.bf16.msra.mxu0 0
    %888 = vmatprep.subr.bf16.mxu0 0
    %889 = vmatpush1.bf16.msra.mxu0 0
    %890 = vmatprep.subr.bf16.mxu0 0
    %891 = vmatpush1.bf16.msra.mxu0 0
    %892 = vmatprep.subr.bf16.mxu0 0
    %893 = vmatpush1.bf16.msra.mxu0 0
    %894 = vmatprep.subr.bf16.mxu0 0
    %895 = vmatpush1.bf16.msra.mxu0 0
    %896 = vmatprep.subr.bf16.mxu0 0
    %897 = vmatpush1.bf16.msra.mxu0 0
    %898 = vmatprep.subr.bf16.mxu0 0
    %899 = vmatpush1.bf16.msra.mxu0 0
    %900 = vmatprep.subr.bf16.mxu0 0
    %901 = vmatpush1.bf16.msra.mxu0 0
    %902 = vmatprep.subr.bf16.mxu0 0
    %903 = vmatpush1.bf16.msra.mxu0 0
    %904 = vmatprep.subr.bf16.mxu0 0
    %905 = vmatpush1.bf16.msra.mxu0 0
    %906 = vmatprep.mubr.bf16.mxu0 0
    %907 = vmatmul.mubr.bf16.gmra.mrb[0].mxu0 %v872
    %v908 = vpop.f32.mrb[0].mxu0
    %v909 = vadd.f32 %v307, %v908
    %v910 = vpop.f32.mrb[0].mxu0
    %v911 = vpop.f32.mrb[0].mxu0
    %v912 = vpop.f32.mrb[0].mxu0
    %913 = vdwg.mxu0
    %v914 = vxor.u32 %v909, 2147483648
    %v915 = vmul.f32 %v914, 1.442695
    %v916 = vpow.pop %v915
    %v917 = vadd.f32 %v916, 1.0
    %v918 = vrcp.pop %v917
    %v919 = vmul.f32 1.0, %v918
    %v920 = vtanh.pop %v909
    %v921 = vmul.f32 %v919, %v776
    %923 = vrot.lane.b32.xlu0 %v920, 80
    %v924 = vpop.permute.xlu0 %923
    %v926 = vmul.f32 %v919, %v924
    %928 = vrot.lane.b32.xlu0 %v926, 16
    %v929 = vpop.permute.xlu0 %928
    %v931 = vadd.f32 %v921, %v929
    %v932 = vtanh.pop %v931
    %934 = vrot.lane.b32.xlu0 %v932, 16
    %v935 = vpop.permute.xlu0 %934
    %v937 = vmul.f32 %v919, %v935
    %939 = vrot.lane.b32.xlu0 %v937, 96
    %v940 = vpop.permute.xlu0 %939
    %942 = vst.msk [vmem:[#allocation4 + $0x3] sm:$0x1] %vm475, %v940
    %943 = vst.msk [vmem:[#allocation4 + $0xa] sm:$0x2] %vm477, %v940
    %v944 = vld [vmem:[#allocation3 + $0x20] sm:$0xff]
    %v945 = vpack.c.bf16 %v861, %v861
    %947 = vrot.lane.b32.xlu0 %v945, 96
    %v948 = vpop.permute.xlu0 %947
    %v950 = vsel %vm317, %v948, 0
    %952 = vmatprep.subr.bf16.mxu0 0
    %953 = vmatpush1.bf16.msra.mxu0 %v295
    %954 = vmatprep.subr.bf16.mxu0 0
    %955 = vmatpush1.bf16.msra.mxu0 0
    %956 = vmatprep.subr.bf16.mxu0 0
    %957 = vmatpush1.bf16.msra.mxu0 0
    %958 = vmatprep.subr.bf16.mxu0 0
    %959 = vmatpush1.bf16.msra.mxu0 0
    %960 = vmatprep.subr.bf16.mxu0 0
    %961 = vmatpush1.bf16.msra.mxu0 0
    %962 = vmatprep.subr.bf16.mxu0 0
    %963 = vmatpush1.bf16.msra.mxu0 0
    %964 = vmatprep.subr.bf16.mxu0 0
    %965 = vmatpush1.bf16.msra.mxu0 0
    %966 = vmatprep.subr.bf16.mxu0 0
    %967 = vmatpush1.bf16.msra.mxu0 0
    %968 = vmatprep.subr.bf16.mxu0 0
    %969 = vmatpush1.bf16.msra.mxu0 0
    %970 = vmatprep.subr.bf16.mxu0 0
    %971 = vmatpush1.bf16.msra.mxu0 0
    %972 = vmatprep.subr.bf16.mxu0 0
    %973 = vmatpush1.bf16.msra.mxu0 0
    %974 = vmatprep.subr.bf16.mxu0 0
    %975 = vmatpush1.bf16.msra.mxu0 0
    %976 = vmatprep.subr.bf16.mxu0 0
    %977 = vmatpush1.bf16.msra.mxu0 0
    %978 = vmatprep.subr.bf16.mxu0 0
    %979 = vmatpush1.bf16.msra.mxu0 0
    %980 = vmatprep.subr.bf16.mxu0 0
    %981 = vmatpush1.bf16.msra.mxu0 0
    %982 = vmatprep.subr.bf16.mxu0 0
    %983 = vmatpush1.bf16.msra.mxu0 0
    %984 = vmatprep.mubr.bf16.mxu0 0
    %985 = vmatmul.mubr.bf16.gmra.mrb[0].mxu0 %v950
    %v986 = vpop.f32.mrb[0].mxu0
    %v987 = vadd.f32 0.0, %v986
    %v988 = vpop.f32.mrb[0].mxu0
    %v989 = vpop.f32.mrb[0].mxu0
    %v990 = vpop.f32.mrb[0].mxu0
    %991 = vdwg.mxu0
    %v992 = vadd.f32 %v944, %v987
    %v993 = vxor.u32 %v992, 2147483648
    %v994 = vmul.f32 %v993, 1.442695
    %v995 = vpow.pop %v994
    %v996 = vadd.f32 %v995, 1.0
    %v997 = vrcp.pop %v996
    %v998 = vmul.f32 1.0, %v997
    %v999 = vtanh.pop %v992
    %v1000 = vmul.f32 %v998, %v855
    %1002 = vrot.lane.b32.xlu0 %v999, 80
    %v1003 = vpop.permute.xlu0 %1002
    %v1005 = vmul.f32 %v998, %v1003
    %1007 = vrot.lane.b32.xlu0 %v1005, 16
    %v1008 = vpop.permute.xlu0 %1007
    %v1010 = vadd.f32 %v1000, %v1008
    %v1011 = vtanh.pop %v1010
    %1013 = vrot.lane.b32.xlu0 %v1011, 16
    %v1014 = vpop.permute.xlu0 %1013
    %v1016 = vmul.f32 %v998, %v1014
    %1018 = vrot.lane.b32.xlu0 %v1016, 96
    %v1019 = vpop.permute.xlu0 %1018
    %1021 = vrot.lane.b32.xlu0 %v937, 112
    %v1022 = vpop.permute.xlu0 %1021
    %v1024 = vsel %vm317, %v1019, %v1022
    %v1025 = vpack.c.bf16 %v1024, %v1024
    %v1027 = vsel %vm134, %v1025, 0
    %1029 = vmatprep.subr.bf16.mxu0 0
    %1030 = vmatpush1.bf16.msra.mxu0 %v300
    %1031 = vmatprep.subr.bf16.mxu0 0
    %1032 = vmatpush1.bf16.msra.mxu0 %v301
    %1033 = vmatprep.subr.bf16.mxu0 0
    %1034 = vmatpush1.bf16.msra.mxu0 0
    %1035 = vmatprep.subr.bf16.mxu0 0
    %1036 = vmatpush1.bf16.msra.mxu0 0
    %1037 = vmatprep.subr.bf16.mxu0 0
    %1038 = vmatpush1.bf16.msra.mxu0 0
    %1039 = vmatprep.subr.bf16.mxu0 0
    %1040 = vmatpush1.bf16.msra.mxu0 0
    %1041 = vmatprep.subr.bf16.mxu0 0
    %1042 = vmatpush1.bf16.msra.mxu0 0
    %1043 = vmatprep.subr.bf16.mxu0 0
    %1044 = vmatpush1.bf16.msra.mxu0 0
    %1045 = vmatprep.subr.bf16.mxu0 0
    %1046 = vmatpush1.bf16.msra.mxu0 0
    %1047 = vmatprep.subr.bf16.mxu0 0
    %1048 = vmatpush1.bf16.msra.mxu0 0
    %1049 = vmatprep.subr.bf16.mxu0 0
    %1050 = vmatpush1.bf16.msra.mxu0 0
    %1051 = vmatprep.subr.bf16.mxu0 0
    %1052 = vmatpush1.bf16.msra.mxu0 0
    %1053 = vmatprep.subr.bf16.mxu0 0
    %1054 = vmatpush1.bf16.msra.mxu0 0
    %1055 = vmatprep.subr.bf16.mxu0 0
    %1056 = vmatpush1.bf16.msra.mxu0 0
    %1057 = vmatprep.subr.bf16.mxu0 0
    %1058 = vmatpush1.bf16.msra.mxu0 0
    %1059 = vmatprep.subr.bf16.mxu0 0
    %1060 = vmatpush1.bf16.msra.mxu0 0
    %1061 = vmatprep.mubr.bf16.mxu0 0
    %1062 = vmatmul.mubr.bf16.gmra.mrb[0].mxu0 %v1027
    %v1063 = vpop.f32.mrb[0].mxu0
    %v1064 = vadd.f32 %v307, %v1063
    %v1065 = vpop.f32.mrb[0].mxu0
    %v1066 = vpop.f32.mrb[0].mxu0
    %v1067 = vpop.f32.mrb[0].mxu0
    %1068 = vdwg.mxu0
    %v1069 = vxor.u32 %v1064, 2147483648
    %v1070 = vmul.f32 %v1069, 1.442695
    %v1071 = vpow.pop %v1070
    %v1072 = vadd.f32 %v1071, 1.0
    %v1073 = vrcp.pop %v1072
    %v1074 = vmul.f32 1.0, %v1073
    %v1075 = vtanh.pop %v1064
    %v1076 = vmul.f32 %v1074, %v931
    %1078 = vrot.lane.b32.xlu0 %v1075, 80
    %v1079 = vpop.permute.xlu0 %1078
    %v1081 = vmul.f32 %v1074, %v1079
    %1083 = vrot.lane.b32.xlu0 %v1081, 16
    %v1084 = vpop.permute.xlu0 %1083
    %v1086 = vadd.f32 %v1076, %v1084
    %v1087 = vtanh.pop %v1086
    %1089 = vrot.lane.b32.xlu0 %v1087, 16
    %v1090 = vpop.permute.xlu0 %1089
    %v1092 = vmul.f32 %v1074, %v1090
    %1094 = vrot.lane.b32.xlu0 %v1092, 96
    %v1095 = vpop.permute.xlu0 %1094
    %1097 = vst.msk [vmem:[#allocation4 + $0x4] sm:$0x1] %vm475, %v1095
    %1098 = vst.msk [vmem:[#allocation4 + $0xb] sm:$0x2] %vm477, %v1095
    %v1099 = vld [vmem:[#allocation3 + $0x28] sm:$0xff]
    %v1100 = vpack.c.bf16 %v1016, %v1016
    %1102 = vrot.lane.b32.xlu0 %v1100, 96
    %v1103 = vpop.permute.xlu0 %1102
    %v1105 = vsel %vm317, %v1103, 0
    %1107 = vmatprep.subr.bf16.mxu0 0
    %1108 = vmatpush1.bf16.msra.mxu0 %v295
    %1109 = vmatprep.subr.bf16.mxu0 0
    %1110 = vmatpush1.bf16.msra.mxu0 0
    %1111 = vmatprep.subr.bf16.mxu0 0
    %1112 = vmatpush1.bf16.msra.mxu0 0
    %1113 = vmatprep.subr.bf16.mxu0 0
    %1114 = vmatpush1.bf16.msra.mxu0 0
    %1115 = vmatprep.subr.bf16.mxu0 0
    %1116 = vmatpush1.bf16.msra.mxu0 0
    %1117 = vmatprep.subr.bf16.mxu0 0
    %1118 = vmatpush1.bf16.msra.mxu0 0
    %1119 = vmatprep.subr.bf16.mxu0 0
    %1120 = vmatpush1.bf16.msra.mxu0 0
    %1121 = vmatprep.subr.bf16.mxu0 0
    %1122 = vmatpush1.bf16.msra.mxu0 0
    %1123 = vmatprep.subr.bf16.mxu0 0
    %1124 = vmatpush1.bf16.msra.mxu0 0
    %1125 = vmatprep.subr.bf16.mxu0 0
    %1126 = vmatpush1.bf16.msra.mxu0 0
    %1127 = vmatprep.subr.bf16.mxu0 0
    %1128 = vmatpush1.bf16.msra.mxu0 0
    %1129 = vmatprep.subr.bf16.mxu0 0
    %1130 = vmatpush1.bf16.msra.mxu0 0
    %1131 = vmatprep.subr.bf16.mxu0 0
    %1132 = vmatpush1.bf16.msra.mxu0 0
    %1133 = vmatprep.subr.bf16.mxu0 0
    %1134 = vmatpush1.bf16.msra.mxu0 0
    %1135 = vmatprep.subr.bf16.mxu0 0
    %1136 = vmatpush1.bf16.msra.mxu0 0
    %1137 = vmatprep.subr.bf16.mxu0 0
    %1138 = vmatpush1.bf16.msra.mxu0 0
    %1139 = vmatprep.mubr.bf16.mxu0 0
    %1140 = vmatmul.mubr.bf16.gmra.mrb[0].mxu0 %v1105
    %v1141 = vpop.f32.mrb[0].mxu0
    %v1142 = vadd.f32 0.0, %v1141
    %v1143 = vpop.f32.mrb[0].mxu0
    %v1144 = vpop.f32.mrb[0].mxu0
    %v1145 = vpop.f32.mrb[0].mxu0
    %1146 = vdwg.mxu0
    %v1147 = vadd.f32 %v1099, %v1142
    %v1148 = vxor.u32 %v1147, 2147483648
    %v1149 = vmul.f32 %v1148, 1.442695
    %v1150 = vpow.pop %v1149
    %v1151 = vadd.f32 %v1150, 1.0
    %v1152 = vrcp.pop %v1151
    %v1153 = vmul.f32 1.0, %v1152
    %v1154 = vtanh.pop %v1147
    %v1155 = vmul.f32 %v1153, %v1010
    %1157 = vrot.lane.b32.xlu0 %v1154, 80
    %v1158 = vpop.permute.xlu0 %1157
    %v1160 = vmul.f32 %v1153, %v1158
    %1162 = vrot.lane.b32.xlu0 %v1160, 16
    %v1163 = vpop.permute.xlu0 %1162
    %v1165 = vadd.f32 %v1155, %v1163
    %v1166 = vtanh.pop %v1165
    %1168 = vrot.lane.b32.xlu0 %v1166, 16
    %v1169 = vpop.permute.xlu0 %1168
    %v1171 = vmul.f32 %v1153, %v1169
    %1173 = vrot.lane.b32.xlu0 %v1171, 96
    %v1174 = vpop.permute.xlu0 %1173
    %1176 = vrot.lane.b32.xlu0 %v1092, 112
    %v1177 = vpop.permute.xlu0 %1176
    %v1179 = vsel %vm317, %v1174, %v1177
    %v1180 = vpack.c.bf16 %v1179, %v1179
    %v1182 = vsel %vm134, %v1180, 0
    %1184 = vmatprep.subr.bf16.mxu0 0
    %1185 = vmatpush1.bf16.msra.mxu0 %v300
    %1186 = vmatprep.subr.bf16.mxu0 0
    %1187 = vmatpush1.bf16.msra.mxu0 %v301
    %1188 = vmatprep.subr.bf16.mxu0 0
    %1189 = vmatpush1.bf16.msra.mxu0 0
    %1190 = vmatprep.subr.bf16.mxu0 0
    %1191 = vmatpush1.bf16.msra.mxu0 0
    %1192 = vmatprep.subr.bf16.mxu0 0
    %1193 = vmatpush1.bf16.msra.mxu0 0
    %1194 = vmatprep.subr.bf16.mxu0 0
    %1195 = vmatpush1.bf16.msra.mxu0 0
    %1196 = vmatprep.subr.bf16.mxu0 0
    %1197 = vmatpush1.bf16.msra.mxu0 0
    %1198 = vmatprep.subr.bf16.mxu0 0
    %1199 = vmatpush1.bf16.msra.mxu0 0
    %1200 = vmatprep.subr.bf16.mxu0 0
    %1201 = vmatpush1.bf16.msra.mxu0 0
    %1202 = vmatprep.subr.bf16.mxu0 0
    %1203 = vmatpush1.bf16.msra.mxu0 0
    %1204 = vmatprep.subr.bf16.mxu0 0
    %1205 = vmatpush1.bf16.msra.mxu0 0
    %1206 = vmatprep.subr.bf16.mxu0 0
    %1207 = vmatpush1.bf16.msra.mxu0 0
    %1208 = vmatprep.subr.bf16.mxu0 0
    %1209 = vmatpush1.bf16.msra.mxu0 0
    %1210 = vmatprep.subr.bf16.mxu0 0
    %1211 = vmatpush1.bf16.msra.mxu0 0
    %1212 = vmatprep.subr.bf16.mxu0 0
    %1213 = vmatpush1.bf16.msra.mxu0 0
    %1214 = vmatprep.subr.bf16.mxu0 0
    %1215 = vmatpush1.bf16.msra.mxu0 0
    %1216 = vmatprep.mubr.bf16.mxu0 0
    %1217 = vmatmul.mubr.bf16.gmra.mrb[0].mxu0 %v1182
    %v1218 = vpop.f32.mrb[0].mxu0
    %v1219 = vadd.f32 %v307, %v1218
    %v1220 = vpop.f32.mrb[0].mxu0
    %v1221 = vpop.f32.mrb[0].mxu0
    %v1222 = vpop.f32.mrb[0].mxu0
    %1223 = vdwg.mxu0
    %v1224 = vxor.u32 %v1219, 2147483648
    %v1225 = vmul.f32 %v1224, 1.442695
    %v1226 = vpow.pop %v1225
    %v1227 = vadd.f32 %v1226, 1.0
    %v1228 = vrcp.pop %v1227
    %v1229 = vmul.f32 1.0, %v1228
    %v1230 = vtanh.pop %v1219
    %v1231 = vmul.f32 %v1229, %v1086
    %1233 = vrot.lane.b32.xlu0 %v1230, 80
    %v1234 = vpop.permute.xlu0 %1233
    %v1236 = vmul.f32 %v1229, %v1234
    %1238 = vrot.lane.b32.xlu0 %v1236, 16
    %v1239 = vpop.permute.xlu0 %1238
    %v1241 = vadd.f32 %v1231, %v1239
    %v1242 = vtanh.pop %v1241
    %1244 = vrot.lane.b32.xlu0 %v1242, 16
    %v1245 = vpop.permute.xlu0 %1244
    %v1247 = vmul.f32 %v1229, %v1245
    %1249 = vrot.lane.b32.xlu0 %v1247, 96
    %v1250 = vpop.permute.xlu0 %1249
    %1252 = vst.msk [vmem:[#allocation4 + $0x5] sm:$0x1] %vm475, %v1250
    %1253 = vst.msk [vmem:[#allocation4 + $0xc] sm:$0x2] %vm477, %v1250
    %v1254 = vld [vmem:[#allocation3 + $0x30] sm:$0xff]
    %v1255 = vpack.c.bf16 %v1171, %v1171
    %1257 = vrot.lane.b32.xlu0 %v1255, 96
    %v1258 = vpop.permute.xlu0 %1257
    %v1260 = vsel %vm317, %v1258, 0
    %1262 = vmatprep.subr.bf16.mxu0 0
    %1263 = vmatpush1.bf16.msra.mxu0 %v295
    %1264 = vmatprep.subr.bf16.mxu0 0
    %1265 = vmatpush1.bf16.msra.mxu0 0
    %1266 = vmatprep.subr.bf16.mxu0 0
    %1267 = vmatpush1.bf16.msra.mxu0 0
    %1268 = vmatprep.subr.bf16.mxu0 0
    %1269 = vmatpush1.bf16.msra.mxu0 0
    %1270 = vmatprep.subr.bf16.mxu0 0
    %1271 = vmatpush1.bf16.msra.mxu0 0
    %1272 = vmatprep.subr.bf16.mxu0 0
    %1273 = vmatpush1.bf16.msra.mxu0 0
    %1274 = vmatprep.subr.bf16.mxu0 0
    %1275 = vmatpush1.bf16.msra.mxu0 0
    %1276 = vmatprep.subr.bf16.mxu0 0
    %1277 = vmatpush1.bf16.msra.mxu0 0
    %1278 = vmatprep.subr.bf16.mxu0 0
    %1279 = vmatpush1.bf16.msra.mxu0 0
    %1280 = vmatprep.subr.bf16.mxu0 0
    %1281 = vmatpush1.bf16.msra.mxu0 0
    %1282 = vmatprep.subr.bf16.mxu0 0
    %1283 = vmatpush1.bf16.msra.mxu0 0
    %1284 = vmatprep.subr.bf16.mxu0 0
    %1285 = vmatpush1.bf16.msra.mxu0 0
    %1286 = vmatprep.subr.bf16.mxu0 0
    %1287 = vmatpush1.bf16.msra.mxu0 0
    %1288 = vmatprep.subr.bf16.mxu0 0
    %1289 = vmatpush1.bf16.msra.mxu0 0
    %1290 = vmatprep.subr.bf16.mxu0 0
    %1291 = vmatpush1.bf16.msra.mxu0 0
    %1292 = vmatprep.subr.bf16.mxu0 0
    %1293 = vmatpush1.bf16.msra.mxu0 0
    %1294 = vmatprep.mubr.bf16.mxu0 0
    %1295 = vmatmul.mubr.bf16.gmra.mrb[0].mxu0 %v1260
    %v1296 = vpop.f32.mrb[0].mxu0
    %v1297 = vadd.f32 0.0, %v1296
    %v1298 = vpop.f32.mrb[0].mxu0
    %v1299 = vpop.f32.mrb[0].mxu0
    %v1300 = vpop.f32.mrb[0].mxu0
    %1301 = vdwg.mxu0
    %v1302 = vadd.f32 %v1254, %v1297
    %v1303 = vxor.u32 %v1302, 2147483648
    %v1304 = vmul.f32 %v1303, 1.442695
    %v1305 = vpow.pop %v1304
    %v1306 = vadd.f32 %v1305, 1.0
    %v1307 = vrcp.pop %v1306
    %v1308 = vmul.f32 1.0, %v1307
    %v1309 = vtanh.pop %v1302
    %v1310 = vmul.f32 %v1308, %v1165
    %1312 = vrot.lane.b32.xlu0 %v1309, 80
    %v1313 = vpop.permute.xlu0 %1312
    %v1315 = vmul.f32 %v1308, %v1313
    %1317 = vrot.lane.b32.xlu0 %v1315, 16
    %v1318 = vpop.permute.xlu0 %1317
    %v1320 = vadd.f32 %v1310, %v1318
    %v1321 = vtanh.pop %v1320
    %1323 = vrot.lane.b32.xlu0 %v1321, 16
    %v1324 = vpop.permute.xlu0 %1323
    %v1326 = vmul.f32 %v1308, %v1324
    %1328 = vrot.lane.b32.xlu0 %v1326, 96
    %v1329 = vpop.permute.xlu0 %1328
    %1331 = vrot.lane.b32.xlu0 %v1247, 112
    %v1332 = vpop.permute.xlu0 %1331
    %v1334 = vsel %vm317, %v1329, %v1332
    %v1335 = vpack.c.bf16 %v1334, %v1334
    %v1337 = vsel %vm134, %v1335, 0
    %1339 = vmatprep.subr.bf16.mxu0 0
    %1340 = vmatpush1.bf16.msra.mxu0 %v300
    %1341 = vmatprep.subr.bf16.mxu0 0
    %1342 = vmatpush1.bf16.msra.mxu0 %v301
    %1343 = vmatprep.subr.bf16.mxu0 0
    %1344 = vmatpush1.bf16.msra.mxu0 0
    %1345 = vmatprep.subr.bf16.mxu0 0
    %1346 = vmatpush1.bf16.msra.mxu0 0
    %1347 = vmatprep.subr.bf16.mxu0 0
    %1348 = vmatpush1.bf16.msra.mxu0 0
    %1349 = vmatprep.subr.bf16.mxu0 0
    %1350 = vmatpush1.bf16.msra.mxu0 0
    %1351 = vmatprep.subr.bf16.mxu0 0
    %1352 = vmatpush1.bf16.msra.mxu0 0
    %1353 = vmatprep.subr.bf16.mxu0 0
    %1354 = vmatpush1.bf16.msra.mxu0 0
    %1355 = vmatprep.subr.bf16.mxu0 0
    %1356 = vmatpush1.bf16.msra.mxu0 0
    %1357 = vmatprep.subr.bf16.mxu0 0
    %1358 = vmatpush1.bf16.msra.mxu0 0
    %1359 = vmatprep.subr.bf16.mxu0 0
    %1360 = vmatpush1.bf16.msra.mxu0 0
    %1361 = vmatprep.subr.bf16.mxu0 0
    %1362 = vmatpush1.bf16.msra.mxu0 0
    %1363 = vmatprep.subr.bf16.mxu0 0
    %1364 = vmatpush1.bf16.msra.mxu0 0
    %1365 = vmatprep.subr.bf16.mxu0 0
    %1366 = vmatpush1.bf16.msra.mxu0 0
    %1367 = vmatprep.subr.bf16.mxu0 0
    %1368 = vmatpush1.bf16.msra.mxu0 0
    %1369 = vmatprep.subr.bf16.mxu0 0
    %1370 = vmatpush1.bf16.msra.mxu0 0
    %1371 = vmatprep.mubr.bf16.mxu0 0
    %1372 = vmatmul.mubr.bf16.gmra.mrb[0].mxu0 %v1337
    %v1373 = vpop.f32.mrb[0].mxu0
    %v1374 = vadd.f32 %v307, %v1373
    %v1375 = vpop.f32.mrb[0].mxu0
    %v1376 = vpop.f32.mrb[0].mxu0
    %v1377 = vpop.f32.mrb[0].mxu0
    %1378 = vdwg.mxu0
    %v1379 = vxor.u32 %v1374, 2147483648
    %v1380 = vmul.f32 %v1379, 1.442695
    %v1381 = vpow.pop %v1380
    %v1382 = vadd.f32 %v1381, 1.0
    %v1383 = vrcp.pop %v1382
    %v1384 = vmul.f32 1.0, %v1383
    %v1385 = vtanh.pop %v1374
    %v1386 = vmul.f32 %v1384, %v1241
    %1388 = vrot.lane.b32.xlu0 %v1385, 80
    %v1389 = vpop.permute.xlu0 %1388
    %v1391 = vmul.f32 %v1384, %v1389
    %1393 = vrot.lane.b32.xlu0 %v1391, 16
    %v1394 = vpop.permute.xlu0 %1393
    %v1396 = vadd.f32 %v1386, %v1394
    %v1397 = vtanh.pop %v1396
    %1399 = vrot.lane.b32.xlu0 %v1397, 16
    %v1400 = vpop.permute.xlu0 %1399
    %v1402 = vmul.f32 %v1384, %v1400
    %1404 = vrot.lane.b32.xlu0 %v1402, 96
    %v1405 = vpop.permute.xlu0 %1404
    %1407 = vst.msk [vmem:[#allocation4 + $0x6] sm:$0x1] %vm475, %v1405
    %1408 = vst.msk [vmem:[#allocation4 + $0xd] sm:$0x2] %vm477, %v1405
    %v1409 = vld [vmem:[#allocation3 + $0x38] sm:$0xff]
    %v1410 = vpack.c.bf16 %v1326, %v1326
    %1412 = vrot.lane.b32.xlu0 %v1410, 96
    %v1413 = vpop.permute.xlu0 %1412
    %v1415 = vsel %vm317, %v1413, 0
    %1417 = vmatprep.subr.bf16.mxu0 0
    %1418 = vmatpush1.bf16.msra.mxu0 %v295
    %1419 = vmatprep.subr.bf16.mxu0 0
    %1420 = vmatpush1.bf16.msra.mxu0 0
    %1421 = vmatprep.subr.bf16.mxu0 0
    %1422 = vmatpush1.bf16.msra.mxu0 0
    %1423 = vmatprep.subr.bf16.mxu0 0
    %1424 = vmatpush1.bf16.msra.mxu0 0
    %1425 = vmatprep.subr.bf16.mxu0 0
    %1426 = vmatpush1.bf16.msra.mxu0 0
    %1427 = vmatprep.subr.bf16.mxu0 0
    %1428 = vmatpush1.bf16.msra.mxu0 0
    %1429 = vmatprep.subr.bf16.mxu0 0
    %1430 = vmatpush1.bf16.msra.mxu0 0
    %1431 = vmatprep.subr.bf16.mxu0 0
    %1432 = vmatpush1.bf16.msra.mxu0 0
    %1433 = vmatprep.subr.bf16.mxu0 0
    %1434 = vmatpush1.bf16.msra.mxu0 0
    %1435 = vmatprep.subr.bf16.mxu0 0
    %1436 = vmatpush1.bf16.msra.mxu0 0
    %1437 = vmatprep.subr.bf16.mxu0 0
    %1438 = vmatpush1.bf16.msra.mxu0 0
    %1439 = vmatprep.subr.bf16.mxu0 0
    %1440 = vmatpush1.bf16.msra.mxu0 0
    %1441 = vmatprep.subr.bf16.mxu0 0
    %1442 = vmatpush1.bf16.msra.mxu0 0
    %1443 = vmatprep.subr.bf16.mxu0 0
    %1444 = vmatpush1.bf16.msra.mxu0 0
    %1445 = vmatprep.subr.bf16.mxu0 0
    %1446 = vmatpush1.bf16.msra.mxu0 0
    %1447 = vmatprep.subr.bf16.mxu0 0
    %1448 = vmatpush1.bf16.msra.mxu0 0
    %1449 = vmatprep.mubr.bf16.mxu0 0
    %1450 = vmatmul.mubr.bf16.gmra.mrb[0].mxu0 %v1415
    %v1451 = vpop.f32.mrb[0].mxu0
    %v1452 = vadd.f32 0.0, %v1451
    %v1453 = vpop.f32.mrb[0].mxu0
    %v1454 = vpop.f32.mrb[0].mxu0
    %v1455 = vpop.f32.mrb[0].mxu0
    %1456 = vdwg.mxu0
    %v1457 = vadd.f32 %v1409, %v1452
    %v1458 = vxor.u32 %v1457, 2147483648
    %v1459 = vmul.f32 %v1458, 1.442695
    %v1460 = vpow.pop %v1459
    %v1461 = vadd.f32 %v1460, 1.0
    %v1462 = vrcp.pop %v1461
    %v1463 = vmul.f32 1.0, %v1462
    %v1464 = vtanh.pop %v1457
    %v1465 = vmul.f32 %v1463, %v1320
    %1467 = vrot.lane.b32.xlu0 %v1464, 80
    %v1468 = vpop.permute.xlu0 %1467
    %v1470 = vmul.f32 %v1463, %v1468
    %1472 = vrot.lane.b32.xlu0 %v1470, 16
    %v1473 = vpop.permute.xlu0 %1472
    %v1475 = vadd.f32 %v1465, %v1473
    %v1476 = vtanh.pop %v1475
    %1478 = vrot.lane.b32.xlu0 %v1476, 16
    %v1479 = vpop.permute.xlu0 %1478
    %v1481 = vmul.f32 %v1463, %v1479
    %1483 = vrot.lane.b32.xlu0 %v1481, 96
    %v1484 = vpop.permute.xlu0 %1483
    %1486 = vrot.lane.b32.xlu0 %v1402, 112
    %v1487 = vpop.permute.xlu0 %1486
    %v1489 = vsel %vm317, %v1484, %v1487
    %v1490 = vpack.c.bf16 %v1489, %v1489
    %v1492 = vsel %vm134, %v1490, 0
    %1494 = vmatprep.subr.bf16.mxu0 0
    %1495 = vmatpush1.bf16.msra.mxu0 %v300
    %1496 = vmatprep.subr.bf16.mxu0 0
    %1497 = vmatpush1.bf16.msra.mxu0 %v301
    %1498 = vmatprep.subr.bf16.mxu0 0
    %1499 = vmatpush1.bf16.msra.mxu0 0
    %1500 = vmatprep.subr.bf16.mxu0 0
    %1501 = vmatpush1.bf16.msra.mxu0 0
    %1502 = vmatprep.subr.bf16.mxu0 0
    %1503 = vmatpush1.bf16.msra.mxu0 0
    %1504 = vmatprep.subr.bf16.mxu0 0
    %1505 = vmatpush1.bf16.msra.mxu0 0
    %1506 = vmatprep.subr.bf16.mxu0 0
    %1507 = vmatpush1.bf16.msra.mxu0 0
    %1508 = vmatprep.subr.bf16.mxu0 0
    %1509 = vmatpush1.bf16.msra.mxu0 0
    %1510 = vmatprep.subr.bf16.mxu0 0
    %1511 = vmatpush1.bf16.msra.mxu0 0
    %1512 = vmatprep.subr.bf16.mxu0 0
    %1513 = vmatpush1.bf16.msra.mxu0 0
    %1514 = vmatprep.subr.bf16.mxu0 0
    %1515 = vmatpush1.bf16.msra.mxu0 0
    %1516 = vmatprep.subr.bf16.mxu0 0
    %1517 = vmatpush1.bf16.msra.mxu0 0
    %1518 = vmatprep.subr.bf16.mxu0 0
    %1519 = vmatpush1.bf16.msra.mxu0 0
    %1520 = vmatprep.subr.bf16.mxu0 0
    %1521 = vmatpush1.bf16.msra.mxu0 0
    %1522 = vmatprep.subr.bf16.mxu0 0
    %1523 = vmatpush1.bf16.msra.mxu0 0
    %1524 = vmatprep.subr.bf16.mxu0 0
    %1525 = vmatpush1.bf16.msra.mxu0 0
    %1526 = vmatprep.mubr.bf16.mxu0 0
    %1527 = vmatmul.mubr.bf16.gmra.mrb[0].mxu0 %v1492
    %v1528 = vpop.f32.mrb[0].mxu0
    %v1529 = vadd.f32 %v307, %v1528
    %v1530 = vpop.f32.mrb[0].mxu0
    %v1531 = vpop.f32.mrb[0].mxu0
    %v1532 = vpop.f32.mrb[0].mxu0
    %1533 = vdwg.mxu0
    %v1534 = vxor.u32 %v1529, 2147483648
    %v1535 = vmul.f32 %v1534, 1.442695
    %v1536 = vpow.pop %v1535
    %v1537 = vadd.f32 %v1536, 1.0
    %v1538 = vrcp.pop %v1537
    %v1539 = vmul.f32 1.0, %v1538
    %v1540 = vtanh.pop %v1529
    %v1541 = vmul.f32 %v1539, %v1396
    %1543 = vrot.lane.b32.xlu0 %v1540, 80
    %v1544 = vpop.permute.xlu0 %1543
    %v1546 = vmul.f32 %v1539, %v1544
    %1548 = vrot.lane.b32.xlu0 %v1546, 16
    %v1549 = vpop.permute.xlu0 %1548
    %v1551 = vadd.f32 %v1541, %v1549
    %v1552 = vtanh.pop %v1551
    %1554 = vrot.lane.b32.xlu0 %v1552, 16
    %v1555 = vpop.permute.xlu0 %1554
    %v1557 = vmul.f32 %v1539, %v1555
    %1559 = vrot.lane.b32.xlu0 %v1557, 96
    %v1560 = vpop.permute.xlu0 %1559
    %1562 = vst.msk [vmem:[#allocation4 + $0x7] sm:$0x1] %vm475, %v1560
    %1563 = vst.msk [vmem:[#allocation4 + $0xe] sm:$0x2] %vm477, %v1560
    %vm1564 = vcmask 123904
    %1565 = vst.msk [vmem:[#allocation17] sm:$0x3] %vm1564, %v1484
    %s1566 = scalar_lea.vmem [#allocation17], 2
    %1567 = vst.msk [vmem:[%s1566] sm:$0x3] %vm1564, %v1560
    %1569 = vrot.lane.b32.xlu0 %v1475, 112
    %v1570 = vpop.permute.xlu0 %1569
    %1572 = vst.msk [vmem:[#allocation19] sm:$0x3] %vm1564, %v1570
    %1574 = vrot.lane.b32.xlu0 %v1551, 112
    %v1575 = vpop.permute.xlu0 %1574
    %s1577 = scalar_lea.vmem [#allocation19], 2
    %1578 = vst.msk [vmem:[%s1577] sm:$0x3] %vm1564, %v1575
    %v1579 = vld [vmem:[#allocation4] sm:$0xff]
    %v1580 = vld [vmem:[#allocation4 + $0x8] sm:$0xff]
    %v1581 = vld [vmem:[#allocation15] sm:$0xff]
    %v1582 = vld [vmem:[#allocation15 + $0x8] sm:$0xff]
    %v1583 = vld [vmem:[%s10] sm:$0x1]
    %v1585 = vlaneseq
    %v1586 = vshrl.u32 %v1585, 7
    %v1587 = vsub.s32 0, %v1586
    %v1588 = vrot.slane %v1583, %v1587
    %v1591 = vsel %vm317, %v1579, 0
    %v1594 = vsel %vm317, %v1580, 0
    %1596 = vmatprep.subr.mxu0 0.0
    %1597 = vmatpush1.msra.mxu0 %v1581
    %1598 = vmatprep.subr.mxu0 0.0
    %1599 = vmatpush1.msra.mxu0 %v1582
    %1600 = vmatprep.subr.mxu0 0.0
    %1601 = vmatpush1.msra.mxu0 0.0
    %1602 = vmatprep.subr.mxu0 0.0
    %1603 = vmatpush1.msra.mxu0 0.0
    %1604 = vmatprep.subr.mxu0 0.0
    %1605 = vmatpush1.msra.mxu0 0.0
    %1606 = vmatprep.subr.mxu0 0.0
    %1607 = vmatpush1.msra.mxu0 0.0
    %1608 = vmatprep.subr.mxu0 0.0
    %1609 = vmatpush1.msra.mxu0 0.0
    %1610 = vmatprep.subr.mxu0 0.0
    %1611 = vmatpush1.msra.mxu0 0.0
    %1612 = vmatprep.subr.mxu0 0.0
    %1613 = vmatpush1.msra.mxu0 0.0
    %1614 = vmatprep.subr.mxu0 0.0
    %1615 = vmatpush1.msra.mxu0 0.0
    %1616 = vmatprep.subr.mxu0 0.0
    %1617 = vmatpush1.msra.mxu0 0.0
    %1618 = vmatprep.subr.mxu0 0.0
    %1619 = vmatpush1.msra.mxu0 0.0
    %1620 = vmatprep.subr.mxu0 0.0
    %1621 = vmatpush1.msra.mxu0 0.0
    %1622 = vmatprep.subr.mxu0 0.0
    %1623 = vmatpush1.msra.mxu0 0.0
    %1624 = vmatprep.subr.mxu0 0.0
    %1625 = vmatpush1.msra.mxu0 0.0
    %1626 = vmatprep.subr.mxu0 0.0
    %1627 = vmatpush1.msra.mxu0 0.0
    %1628 = vmatprep.subr.mxu0 0.0
    %1629 = vmatpush1.msra.mxu0 0.0
    %1630 = vmatprep.subr.mxu0 0.0
    %1631 = vmatpush1.msra.mxu0 0.0
    %1632 = vmatprep.subr.mxu0 0.0
    %1633 = vmatpush1.msra.mxu0 0.0
    %1634 = vmatprep.subr.mxu0 0.0
    %1635 = vmatpush1.msra.mxu0 0.0
    %1636 = vmatprep.subr.mxu0 0.0
    %1637 = vmatpush1.msra.mxu0 0.0
    %1638 = vmatprep.subr.mxu0 0.0
    %1639 = vmatpush1.msra.mxu0 0.0
    %1640 = vmatprep.subr.mxu0 0.0
    %1641 = vmatpush1.msra.mxu0 0.0
    %1642 = vmatprep.subr.mxu0 0.0
    %1643 = vmatpush1.msra.mxu0 0.0
    %1644 = vmatprep.subr.mxu0 0.0
    %1645 = vmatpush1.msra.mxu0 0.0
    %1646 = vmatprep.subr.mxu0 0.0
    %1647 = vmatpush1.msra.mxu0 0.0
    %1648 = vmatprep.subr.mxu0 0.0
    %1649 = vmatpush1.msra.mxu0 0.0
    %1650 = vmatprep.subr.mxu0 0.0
    %1651 = vmatpush1.msra.mxu0 0.0
    %1652 = vmatprep.subr.mxu0 0.0
    %1653 = vmatpush1.msra.mxu0 0.0
    %1654 = vmatprep.subr.mxu0 0.0
    %1655 = vmatpush1.msra.mxu0 0.0
    %1656 = vmatprep.subr.mxu0 0.0
    %1657 = vmatpush1.msra.mxu0 0.0
    %1658 = vmatprep.subr.mxu0 0.0
    %1659 = vmatpush1.msra.mxu0 0.0
    %1660 = vmatprep.mubr.f32.mxu0 0.0
    %1661 = vmatmul.mubr.f32.gmra.mrb[0].mxu0 %v1591
    %v1662 = vpop.f32.mrb[0].mxu0
    %v1663 = vadd.f32 %v1588, %v1662
    %v1664 = vpop.f32.mrb[0].mxu0
    %1665 = vmatprep.mubr.f32.mxu0 0.0
    %1666 = vmatmul.mubr.f32.gmra.mrb[0].mxu0 %v1594
    %v1667 = vpop.f32.mrb[0].mxu0
    %v1668 = vadd.f32 %v1588, %v1667
    %v1669 = vpop.f32.mrb[0].mxu0
    %1670 = vdwg.mxu0
    %vm1671 = vcmask 121856
    %v1672 = vsel %vm1671, %v1663, -inf
    %1673 = vmax.xlane.f32.xlu0 %v1672
    %v1674 = vpop.xlane.xlu0 %1673
    %v1675 = vsel %vm1671, %v1668, -inf
    %1676 = vmax.xlane.f32.xlu0 %v1675
    %v1677 = vpop.xlane.xlu0 %1676
    %v1678 = vsub.f32 %v1663, %v1674
    %v1679 = vsub.f32 %v1668, %v1677
    %v1680 = vmul.f32 %v1678, 1.442695
    %v1681 = vpow.pop %v1680
    %v1682 = vmul.f32 %v1679, 1.442695
    %v1683 = vpow.pop %v1682
    %v1684 = vsel %vm1671, %v1681, 0.0
    %1685 = vadd.xlane.f32.xlu0 %v1684
    %v1686 = vpop.xlane.xlu0 %1685
    %v1687 = vsel %vm1671, %v1683, 0.0
    %1688 = vadd.xlane.f32.xlu0 %v1687
    %v1689 = vpop.xlane.xlu0 %1688
    %v1690 = vrcp.pop %v1686
    %v1691 = vmul.f32 %v1681, %v1690
    %v1692 = vrcp.pop %v1689
    %v1693 = vmul.f32 %v1683, %v1692
    %1694 = vst.msk [vmem:[#allocation16] sm:$0xff] %vm1671, %v1691
    %1695 = vst.msk [vmem:[#allocation16 + $0x8] sm:$0xff] %vm1671, %v1693
    // Predicated region
    $region70: #{lstm_forward.1} parent=1 // pred_check
      _
    $region71: #{lstm_forward.1} parent=1 // pred_check_branch
      %1697 = sbr.rel (0) target = $region73
    $region72: #{lstm_forward.1} parent=1 // pred_region
      %s1699 = ssub.s32 256, 256
      %1700 = vsyncadd [#allocation7], %s1699
      %s1701 = sshll.u32 [#allocation16], 4
      %s1702 = int_to_ptr.vmem [resolvable:$true] %s1701
      %1707 = dma.vmem_to_hbm [thread:$0]  %s1702, 256, %s11, [#allocation7], 128, 128, 8
    $region73: #{lstm_forward.1} parent=1 // pred_fallthru
      _
    // Predicated region
    $region74: #{lstm_forward.1} parent=1 // pred_check
      _
    $region75: #{lstm_forward.1} parent=1 // pred_check_branch
      %1709 = sbr.rel (0) target = $region77
    $region76: #{lstm_forward.1} parent=1 // pred_region
      %s1711 = ssub.s32 64, 64
      %1712 = vsyncadd [#allocation18], %s1711
      %s1713 = sshll.u32 [#allocation17], 4
      %s1714 = int_to_ptr.vmem [resolvable:$true] %s1713
      %1719 = dma.vmem_to_hbm [thread:$0]  %s1714, 64, %s12, [#allocation18], 32, 32, 2
    $region77: #{lstm_forward.1} parent=1 // pred_fallthru
      _
    // Predicated region
    $region78: #{lstm_forward.1} parent=1 // pred_check
      _
    $region79: #{lstm_forward.1} parent=1 // pred_check_branch
      %1721 = sbr.rel (0) target = $region81
    $region80: #{lstm_forward.1} parent=1 // pred_region
      %s1723 = ssub.s32 64, 64
      %1724 = vsyncadd [#allocation18], %s1723
      %s1725 = sshll.u32 [#allocation19], 4
      %s1726 = int_to_ptr.vmem [resolvable:$true] %s1725
      %1731 = dma.vmem_to_hbm [thread:$0]  %s1726, 64, %s13, [#allocation18], 32, 32, 2
    $region81: #{lstm_forward.1} parent=1 // pred_fallthru
      _
    // Predicated region
    $region82: #{lstm_forward.1} parent=1 // pred_check
      _
    $region83: #{lstm_forward.1} parent=1 // pred_check_branch
      %1733 = sbr.rel (0) target = $region85
    $region84: #{lstm_forward.1} parent=1 // pred_region
      %1734 = dma.done [#allocation7], 256
    $region85: #{lstm_forward.1} parent=1 // pred_fallthru
      _
    // Predicated region
    $region86: #{lstm_forward.1} parent=1 // pred_check
      _
    $region87: #{lstm_forward.1} parent=1 // pred_check_branch
      %1736 = sbr.rel (0) target = $region89
    $region88: #{lstm_forward.1} parent=1 // pred_region
      %1737 = dma.done [#allocation18], 64
    $region89: #{lstm_forward.1} parent=1 // pred_fallthru
      _
    // Predicated region
    $region90: #{lstm_forward.1} parent=1 // pred_check
      _
    $region91: #{lstm_forward.1} parent=1 // pred_check_branch
      %1739 = sbr.rel (0) target = $region93
    $region92: #{lstm_forward.1} parent=1 // pred_region
      %1740 = dma.done [#allocation18], 64
    $region93: #{lstm_forward.1} parent=1 // pred_fallthru
      _
    %1741 = vsyncpa [#allocation6], 1
    %1742 = vsyncpa [#allocation11], 1
    %1743 = vsyncpa [#allocation14], 1
    %1744 = vsyncpa [#allocation7], 1
    %1745 = vsyncpa [#allocation18], 1
    %1746 = vsyncpa [#allocation8], 1

</llo_original>
